<compile_context>
chip_gen: v6e
topology: v6e:2x2x1
jax: 0.10.0
libtpu: 0.0.40
codegen_flags: <defaults>
</compile_context>

<pallas_src>
from functools import partial

import jax
import jax.numpy as jnp
from jax import lax
from jax.experimental import pallas as pl
from jax.experimental.pallas import tpu as pltpu


def _lstm_encoder_kernel(ids_ref, wx_ref, whh_ref, h_out_ref, out_ref, xg_ref):
    """Embedding + input projection (hoisted, fused) + LSTM recurrence.

    ids_ref  : (S*Np, 1) int32       token ids, time-major flattened (row t*Np + n)
    wx_ref   : (V+1, 4H) bf16/f32    emb @ W_ih^T with (b_ih + b_hh) as the last row,
                                     gate columns permuted to (i, f, o, g)
    whh_ref  : (H, 4H)   bf16/f32    W_hh^T, gate columns permuted to (i, f, o, g)
    h_out_ref: (Np, H)   f32         final hidden state
    out_ref  : (Np, S*H) f32         per-step hidden states, batch-major lane-dense
    xg_ref   : (S, Np, 4H) f32       scratch: hoisted gate pre-activations
    """
    S, Np, W = xg_ref.shape
    H = W // 4
    Vp1 = wx_ref.shape[0]
    cdt = wx_ref.dtype                       # MXU operand dtype (bf16 on v6e/v7x path)

    # ---- hoisted input projection: all S*Np tokens in ONE fused matmul ----------------
    ids = ids_ref[...]                                               # (S*Np, 1)
    col = lax.broadcasted_iota(jnp.int32, (S * Np, Vp1), 1)
    # Augmented one-hot: 1 at the token column plus a constant 1 in the bias column.
    onehot = ((ids == col) | (col == Vp1 - 1)).astype(cdt)           # (S*Np, V+1)
    proj = jnp.dot(onehot, wx_ref[...], preferred_element_type=jnp.float32)  # (S*Np, 4H)
    for t in range(S):                                               # tile-aligned stores
        xg_ref[t] = proj[t * Np:(t + 1) * Np, :]

    # Recurrent weights stay resident for the whole loop.
    whh = whh_ref[...]                                               # (H, 4H)

    h = jnp.zeros((Np, H), jnp.float32)
    c = jnp.zeros((Np, H), jnp.float32)

    # Serial recurrence: one full-lane MXU push + one merged sigmoid + one tanh per step.
    for t in range(S):
        z = jnp.dot(h.astype(cdt), whh,
                    preferred_element_type=jnp.float32) + xg_ref[t]  # (Np, 4H) f32
        sig = jax.nn.sigmoid(z[:, :3 * H])                           # i | f | o (contiguous)
        g_g = jnp.tanh(z[:, 3 * H:])
        i_g = sig[:, :H]
        f_g = sig[:, H:2 * H]
        o_g = sig[:, 2 * H:]
        c = f_g * c + i_g * g_g
        h = o_g * jnp.tanh(c)
        # Direct lane-offset store to the batch-major output (off the h/c chain).
        out_ref[:, t * H:(t + 1) * H] = h

    h_out_ref[...] = h


def init_params(key, num_buckets, emb_size, hidden_size):
    """Deterministic parameter init mirroring the PyTorch module's shapes."""
    V = num_buckets + 4
    H = hidden_size
    k_emb, k_wih, k_whh, k_bih, k_bhh = jax.random.split(key, 5)
    bound = 1.0 / jnp.sqrt(jnp.float32(H))

    emb = jax.random.normal(k_emb, (V, emb_size), jnp.float32)
    emb = emb.at[3].set(0.0)                                         # padding_idx=3

    w_ih = jax.random.uniform(k_wih, (4 * H, emb_size), jnp.float32, -bound, bound)
    w_hh = jax.random.uniform(k_whh, (4 * H, H), jnp.float32, -bound, bound)
    b_ih = jax.random.uniform(k_bih, (4 * H,), jnp.float32, -bound, bound)
    b_hh = jax.random.uniform(k_bhh, (4 * H,), jnp.float32, -bound, bound)
    return dict(emb=emb, w_ih=w_ih, w_hh=w_hh, b_ih=b_ih, b_hh=b_hh)


@partial(jax.jit, static_argnames=("compute_dtype",))
def step_selector_encoder(X, emb, w_ih, w_hh, b_ih, b_hh,
                          compute_dtype=jnp.bfloat16):
    """Pallas-backed forward: returns (h, out) like the PyTorch module.

    X : (N, S) int32  ->  h : (1, N, H) f32,  out : (N, S, H) f32
    compute_dtype: dtype of the MXU operands (bf16 recommended on v6e/v7x; element-wise
    math and accumulation are always f32, so v5e stays on its fast VPU/EUP path).
    """
    N, S = X.shape
    V, E = emb.shape
    H = w_hh.shape[1]

    # Pad batch to the f32 sublane multiple so every per-step tile is aligned.
    SUB = 8
    Np = ((N + SUB - 1) // SUB) * SUB
    X_p = jnp.pad(X.astype(jnp.int32), ((0, Np - N), (0, 0)), constant_values=3)

    # Token ids, time-major, flattened (tiny int transpose; the big output tensor is
    # produced directly in batch-major lane-dense layout by the kernel).
    ids_tm = jnp.transpose(X_p).reshape(S * Np, 1)

    # Fold the embedding table into the input projection (once per weight set):
    #   emb(x) @ W_ih^T == onehot(x) @ (emb @ W_ih^T);  bias rides as an extra row.
    wx = jnp.dot(emb, w_ih.T)                                        # (V, 4H)
    wx_aug = jnp.concatenate([wx, (b_ih + b_hh)[None, :]], axis=0)   # (V+1, 4H)

    # Permute gates (i, f, g, o) -> (i, f, o, g): the three sigmoid gates become
    # lane-contiguous and the recurrent matmul stays a single (H, 4H) operand.
    idx = jnp.arange(H)
    gate_perm = jnp.concatenate([idx, idx + H, idx + 3 * H, idx + 2 * H])
    wx_aug = wx_aug[:, gate_perm].astype(compute_dtype)              # (V+1, 4H)
    whh = w_hh.T[:, gate_perm].astype(compute_dtype)                 # (H, 4H)

    vmem = pl.BlockSpec(memory_space=pltpu.MemorySpace.VMEM)

    # Explicit VMEM budget sized from the real resident footprint (with headroom).
    cbytes = jnp.dtype(compute_dtype).itemsize
    resident = (S * Np * 4 * H * 4            # xg scratch (f32)
                + (V + 1) * 4 * H * cbytes    # wx_aug
                + H * 4 * H * cbytes          # whh
                + Np * S * H * 4              # out block
                + Np * H * 4                  # h_out
                + S * Np * 4)                 # ids
    vmem_limit = int(min(64 * 1024 * 1024, max(16 * 1024 * 1024, 2 * resident)))

    h_fin, out2d = pl.pallas_call(
        _lstm_encoder_kernel,
        out_shape=(
            jax.ShapeDtypeStruct((Np, H), jnp.float32),
            jax.ShapeDtypeStruct((Np, S * H), jnp.float32),
        ),
        in_specs=[vmem, vmem, vmem],
        out_specs=(vmem, vmem),
        scratch_shapes=[
            pltpu.VMEM((S, Np, 4 * H), jnp.float32),   # hoisted gate pre-activations
        ],
        compiler_params=pltpu.CompilerParams(vmem_limit_bytes=vmem_limit),
    )(ids_tm, wx_aug, whh)

    h = h_fin[:N][None, :, :]                  # (1, N, H)
    out = out2d[:N].reshape(N, S, H)           # (N, S, H)
    return h, out


def _reference_forward(X, emb, w_ih, w_hh, b_ih, b_hh):
    """Pure-JAX reference reproducing torch.nn.Embedding + nn.LSTM semantics (f32)."""
    N, S = X.shape
    H = w_hh.shape[1]
    we = emb[X]                               # (N, S, E)

    def step(carry, x_t):
        h, c = carry
        gates = x_t @ w_ih.T + b_ih + h @ w_hh.T + b_hh
        i, f, g, o = jnp.split(gates, 4, axis=-1)
        i = jax.nn.sigmoid(i)
        f = jax.nn.sigmoid(f)
        g = jnp.tanh(g)
        o = jax.nn.sigmoid(o)
        c = f * c + i * g
        h = o * jnp.tanh(c)
        return (h, c), h

    init = (jnp.zeros((N, H), jnp.float32), jnp.zeros((N, H), jnp.float32))
    (h_fin, _), outs = lax.scan(step, init, jnp.swapaxes(we, 0, 1))
    return h_fin[None, :, :], jnp.swapaxes(outs, 0, 1)


if __name__ == "__main__":
    # Small, module-consistent sizes.
    num_buckets = 12          # -> vocab V = num_buckets + 4 = 16
    emb_size = 32
    hidden_size = 32
    N, S = 2, 8

    key = jax.random.PRNGKey(0)
    k_param, k_ids = jax.random.split(key)
    params = init_params(k_param, num_buckets, emb_size, hidden_size)

    X = jax.random.randint(k_ids, (N, S), 0, num_buckets + 4, dtype=jnp.int32)

    h_exp, out_exp = _reference_forward(
        X, params["emb"], params["w_ih"], params["w_hh"],
        params["b_ih"], params["b_hh"])

    # f32 MXU path: must match the f32 reference tightly.
    h32, out32 = step_selector_encoder(
        X, params["emb"], params["w_ih"], params["w_hh"],
        params["b_ih"], params["b_hh"], compute_dtype=jnp.float32)
    jax.block_until_ready((h32, out32))
    assert h32.shape == (1, N, hidden_size)
    assert out32.shape == (N, S, hidden_size)
    assert jnp.allclose(h32, h_exp, rtol=1e-4, atol=1e-4)
    assert jnp.allclose(out32, out_exp, rtol=1e-4, atol=1e-4)

    # bf16 MXU path (production default): looser tolerance, f32 accumulation/elementwise.
    h16, out16 = step_selector_encoder(
        X, params["emb"], params["w_ih"], params["w_hh"],
        params["b_ih"], params["b_hh"], compute_dtype=jnp.bfloat16)
    jax.block_until_ready((h16, out16))
    assert h16.shape == (1, N, hidden_size)
    assert out16.shape == (N, S, hidden_size)
    assert jnp.allclose(h16, h_exp, rtol=3e-2, atol=3e-2)
    assert jnp.allclose(out16, out_exp, rtol=3e-2, atol=3e-2)

    print("KERNEL_OK")
</pallas_src>

<mosaic_0001>
module attributes {stable_mosaic.version = 11 : i64} {
  func.func @_lstm_encoder_kernel(%arg0: memref<64x1xi32, #tpu.memory_space<vmem>>, %arg1: memref<17x128xf32, #tpu.memory_space<vmem>>, %arg2: memref<32x128xf32, #tpu.memory_space<vmem>>, %arg3: memref<8x32xf32, #tpu.memory_space<vmem>>, %arg4: memref<8x256xf32, #tpu.memory_space<vmem>>, %arg5: memref<8x8x128xf32, #tpu.memory_space<vmem>>) attributes {dimension_semantics = [], scalar_prefetch = 0 : i64, scratch_operands = 1 : i64, tpu.core_type = #tpu.core_type<tc>} {
    %c0 = arith.constant 0 : index
    %c0_0 = arith.constant 0 : index
    %0 = vector.load %arg0[%c0, %c0_0] : memref<64x1xi32, #tpu.memory_space<vmem>>, vector<64x1xi32>
    %1 = tpu.iota {dimensions = array<i32: 1>} : vector<64x17xi32>
    %2 = vector.broadcast %0 : vector<64x1xi32> to vector<64x17xi32>
    %3 = arith.cmpi eq, %2, %1 : vector<64x17xi32>
    %c16_i32 = arith.constant 16 : i32
    %4 = vector.broadcast %c16_i32 : i32 to vector<64x17xi32>
    %5 = arith.cmpi eq, %1, %4 : vector<64x17xi32>
    %6 = arith.ori %3, %5 : vector<64x17xi1>
    %7 = arith.extui %6 : vector<64x17xi1> to vector<64x17xi32>
    %8 = arith.sitofp %7 : vector<64x17xi32> to vector<64x17xf32>
    %c0_1 = arith.constant 0 : index
    %c0_2 = arith.constant 0 : index
    %9 = vector.load %arg1[%c0_1, %c0_2] : memref<17x128xf32, #tpu.memory_space<vmem>>, vector<17x128xf32>
    %cst = arith.constant dense<0.000000e+00> : vector<64x128xf32>
    %10 = tpu.matmul %8, %9, %cst {dimension_numbers = #tpu.dot_dimension_numbers<[1], [0], [0], [1], [0, 0, 1, 1], [], []>} : vector<64x17xf32>, vector<17x128xf32>, vector<64x128xf32> -> vector<64x128xf32>
    %11 = vector.extract_strided_slice %10 {offsets = [0, 0], sizes = [8, 128], strides = [1, 1]} : vector<64x128xf32> to vector<8x128xf32>
    %c0_3 = arith.constant 0 : index
    %c0_4 = arith.constant 0 : index
    %c0_5 = arith.constant 0 : index
    %12 = vector.load %arg5[%c0_3, %c0_4, %c0_5] : memref<8x8x128xf32, #tpu.memory_space<vmem>>, vector<1x8x128xf32>
    %13 = vector.shape_cast %12 : vector<1x8x128xf32> to vector<8x128xf32>
    %14 = vector.shape_cast %11 : vector<8x128xf32> to vector<1x8x128xf32>
    tpu.vector_store %arg5[%c0_3, %c0_4, %c0_5], %14 {strides = array<i32>} : memref<8x8x128xf32, #tpu.memory_space<vmem>>, vector<1x8x128xf32>,
    %15 = vector.extract_strided_slice %10 {offsets = [8, 0], sizes = [8, 128], strides = [1, 1]} : vector<64x128xf32> to vector<8x128xf32>
    %c1 = arith.constant 1 : index
    %c0_6 = arith.constant 0 : index
    %c0_7 = arith.constant 0 : index
    %16 = vector.load %arg5[%c1, %c0_6, %c0_7] : memref<8x8x128xf32, #tpu.memory_space<vmem>>, vector<1x8x128xf32>
    %17 = vector.shape_cast %16 : vector<1x8x128xf32> to vector<8x128xf32>
    %18 = vector.shape_cast %15 : vector<8x128xf32> to vector<1x8x128xf32>
    tpu.vector_store %arg5[%c1, %c0_6, %c0_7], %18 {strides = array<i32>} : memref<8x8x128xf32, #tpu.memory_space<vmem>>, vector<1x8x128xf32>,
    %19 = vector.extract_strided_slice %10 {offsets = [16, 0], sizes = [8, 128], strides = [1, 1]} : vector<64x128xf32> to vector<8x128xf32>
    %c2 = arith.constant 2 : index
    %c0_8 = arith.constant 0 : index
    %c0_9 = arith.constant 0 : index
    %20 = vector.load %arg5[%c2, %c0_8, %c0_9] : memref<8x8x128xf32, #tpu.memory_space<vmem>>, vector<1x8x128xf32>
    %21 = vector.shape_cast %20 : vector<1x8x128xf32> to vector<8x128xf32>
    %22 = vector.shape_cast %19 : vector<8x128xf32> to vector<1x8x128xf32>
    tpu.vector_store %arg5[%c2, %c0_8, %c0_9], %22 {strides = array<i32>} : memref<8x8x128xf32, #tpu.memory_space<vmem>>, vector<1x8x128xf32>,
    %23 = vector.extract_strided_slice %10 {offsets = [24, 0], sizes = [8, 128], strides = [1, 1]} : vector<64x128xf32> to vector<8x128xf32>
    %c3 = arith.constant 3 : index
    %c0_10 = arith.constant 0 : index
    %c0_11 = arith.constant 0 : index
    %24 = vector.load %arg5[%c3, %c0_10, %c0_11] : memref<8x8x128xf32, #tpu.memory_space<vmem>>, vector<1x8x128xf32>
    %25 = vector.shape_cast %24 : vector<1x8x128xf32> to vector<8x128xf32>
    %26 = vector.shape_cast %23 : vector<8x128xf32> to vector<1x8x128xf32>
    tpu.vector_store %arg5[%c3, %c0_10, %c0_11], %26 {strides = array<i32>} : memref<8x8x128xf32, #tpu.memory_space<vmem>>, vector<1x8x128xf32>,
    %27 = vector.extract_strided_slice %10 {offsets = [32, 0], sizes = [8, 128], strides = [1, 1]} : vector<64x128xf32> to vector<8x128xf32>
    %c4 = arith.constant 4 : index
    %c0_12 = arith.constant 0 : index
    %c0_13 = arith.constant 0 : index
    %28 = vector.load %arg5[%c4, %c0_12, %c0_13] : memref<8x8x128xf32, #tpu.memory_space<vmem>>, vector<1x8x128xf32>
    %29 = vector.shape_cast %28 : vector<1x8x128xf32> to vector<8x128xf32>
    %30 = vector.shape_cast %27 : vector<8x128xf32> to vector<1x8x128xf32>
    tpu.vector_store %arg5[%c4, %c0_12, %c0_13], %30 {strides = array<i32>} : memref<8x8x128xf32, #tpu.memory_space<vmem>>, vector<1x8x128xf32>,
    %31 = vector.extract_strided_slice %10 {offsets = [40, 0], sizes = [8, 128], strides = [1, 1]} : vector<64x128xf32> to vector<8x128xf32>
    %c5 = arith.constant 5 : index
    %c0_14 = arith.constant 0 : index
    %c0_15 = arith.constant 0 : index
    %32 = vector.load %arg5[%c5, %c0_14, %c0_15] : memref<8x8x128xf32, #tpu.memory_space<vmem>>, vector<1x8x128xf32>
    %33 = vector.shape_cast %32 : vector<1x8x128xf32> to vector<8x128xf32>
    %34 = vector.shape_cast %31 : vector<8x128xf32> to vector<1x8x128xf32>
    tpu.vector_store %arg5[%c5, %c0_14, %c0_15], %34 {strides = array<i32>} : memref<8x8x128xf32, #tpu.memory_space<vmem>>, vector<1x8x128xf32>,
    %35 = vector.extract_strided_slice %10 {offsets = [48, 0], sizes = [8, 128], strides = [1, 1]} : vector<64x128xf32> to vector<8x128xf32>
    %c6 = arith.constant 6 : index
    %c0_16 = arith.constant 0 : index
    %c0_17 = arith.constant 0 : index
    %36 = vector.load %arg5[%c6, %c0_16, %c0_17] : memref<8x8x128xf32, #tpu.memory_space<vmem>>, vector<1x8x128xf32>
    %37 = vector.shape_cast %36 : vector<1x8x128xf32> to vector<8x128xf32>
    %38 = vector.shape_cast %35 : vector<8x128xf32> to vector<1x8x128xf32>
    tpu.vector_store %arg5[%c6, %c0_16, %c0_17], %38 {strides = array<i32>} : memref<8x8x128xf32, #tpu.memory_space<vmem>>, vector<1x8x128xf32>,
    %39 = vector.extract_strided_slice %10 {offsets = [56, 0], sizes = [8, 128], strides = [1, 1]} : vector<64x128xf32> to vector<8x128xf32>
    %c7 = arith.constant 7 : index
    %c0_18 = arith.constant 0 : index
    %c0_19 = arith.constant 0 : index
    %40 = vector.load %arg5[%c7, %c0_18, %c0_19] : memref<8x8x128xf32, #tpu.memory_space<vmem>>, vector<1x8x128xf32>
    %41 = vector.shape_cast %40 : vector<1x8x128xf32> to vector<8x128xf32>
    %42 = vector.shape_cast %39 : vector<8x128xf32> to vector<1x8x128xf32>
    tpu.vector_store %arg5[%c7, %c0_18, %c0_19], %42 {strides = array<i32>} : memref<8x8x128xf32, #tpu.memory_space<vmem>>, vector<1x8x128xf32>,
    %c0_20 = arith.constant 0 : index
    %c0_21 = arith.constant 0 : index
    %43 = vector.load %arg2[%c0_20, %c0_21] : memref<32x128xf32, #tpu.memory_space<vmem>>, vector<32x128xf32>
    %cst_22 = arith.constant 0.000000e+00 : f32
    %44 = vector.broadcast %cst_22 : f32 to vector<8x32xf32>
    %cst_23 = arith.constant 0.000000e+00 : f32
    %45 = vector.broadcast %cst_23 : f32 to vector<8x32xf32>
    %cst_24 = arith.constant dense<0.000000e+00> : vector<8x128xf32>
    %46 = tpu.matmul %44, %43, %cst_24 {dimension_numbers = #tpu.dot_dimension_numbers<[1], [0], [0], [1], [0, 0, 1, 1], [], []>} : vector<8x32xf32>, vector<32x128xf32>, vector<8x128xf32> -> vector<8x128xf32>
    %c0_25 = arith.constant 0 : index
    %c0_26 = arith.constant 0 : index
    %c0_27 = arith.constant 0 : index
    %47 = vector.load %arg5[%c0_25, %c0_26, %c0_27] : memref<8x8x128xf32, #tpu.memory_space<vmem>>, vector<1x8x128xf32>
    %48 = vector.shape_cast %47 : vector<1x8x128xf32> to vector<8x128xf32>
    %49 = arith.addf %46, %48 : vector<8x128xf32>
    %50 = vector.extract_strided_slice %49 {offsets = [0, 0], sizes = [8, 96], strides = [1, 1]} : vector<8x128xf32> to vector<8x96xf32>
    %51 = arith.negf %50 : vector<8x96xf32>
    %52 = math.exp %51 : vector<8x96xf32>
    %cst_28 = arith.constant 1.000000e+00 : f32
    %53 = vector.broadcast %cst_28 : f32 to vector<8x96xf32>
    %54 = arith.addf %53, %52 : vector<8x96xf32>
    %55 = arith.divf %53, %54 : vector<8x96xf32>
    %56 = vector.extract_strided_slice %49 {offsets = [0, 96], sizes = [8, 32], strides = [1, 1]} : vector<8x128xf32> to vector<8x32xf32>
    %57 = math.tanh %56 : vector<8x32xf32>
    %58 = vector.extract_strided_slice %55 {offsets = [0, 0], sizes = [8, 32], strides = [1, 1]} : vector<8x96xf32> to vector<8x32xf32>
    %59 = vector.extract_strided_slice %55 {offsets = [0, 32], sizes = [8, 32], strides = [1, 1]} : vector<8x96xf32> to vector<8x32xf32>
    %60 = vector.extract_strided_slice %55 {offsets = [0, 64], sizes = [8, 32], strides = [1, 1]} : vector<8x96xf32> to vector<8x32xf32>
    %61 = arith.mulf %59, %45 : vector<8x32xf32>
    %62 = arith.mulf %58, %57 : vector<8x32xf32>
    %63 = arith.addf %61, %62 : vector<8x32xf32>
    %64 = math.tanh %63 : vector<8x32xf32>
    %65 = arith.mulf %60, %64 : vector<8x32xf32>
    %c0_29 = arith.constant 0 : index
    %c0_30 = arith.constant 0 : index
    %66 = vector.load %arg4[%c0_29, %c0_30] : memref<8x256xf32, #tpu.memory_space<vmem>>, vector<8x32xf32>
    tpu.vector_store %arg4[%c0_29, %c0_30], %65 {strides = array<i32>} : memref<8x256xf32, #tpu.memory_space<vmem>>, vector<8x32xf32>,
    %cst_31 = arith.constant dense<0.000000e+00> : vector<8x128xf32>
    %67 = tpu.matmul %65, %43, %cst_31 {dimension_numbers = #tpu.dot_dimension_numbers<[1], [0], [0], [1], [0, 0, 1, 1], [], []>} : vector<8x32xf32>, vector<32x128xf32>, vector<8x128xf32> -> vector<8x128xf32>
    %c1_32 = arith.constant 1 : index
    %c0_33 = arith.constant 0 : index
    %c0_34 = arith.constant 0 : index
    %68 = vector.load %arg5[%c1_32, %c0_33, %c0_34] : memref<8x8x128xf32, #tpu.memory_space<vmem>>, vector<1x8x128xf32>
    %69 = vector.shape_cast %68 : vector<1x8x128xf32> to vector<8x128xf32>
    %70 = arith.addf %67, %69 : vector<8x128xf32>
    %71 = vector.extract_strided_slice %70 {offsets = [0, 0], sizes = [8, 96], strides = [1, 1]} : vector<8x128xf32> to vector<8x96xf32>
    %72 = arith.negf %71 : vector<8x96xf32>
    %73 = math.exp %72 : vector<8x96xf32>
    %cst_35 = arith.constant 1.000000e+00 : f32
    %74 = vector.broadcast %cst_35 : f32 to vector<8x96xf32>
    %75 = arith.addf %74, %73 : vector<8x96xf32>
    %76 = arith.divf %74, %75 : vector<8x96xf32>
    %77 = vector.extract_strided_slice %70 {offsets = [0, 96], sizes = [8, 32], strides = [1, 1]} : vector<8x128xf32> to vector<8x32xf32>
    %78 = math.tanh %77 : vector<8x32xf32>
    %79 = vector.extract_strided_slice %76 {offsets = [0, 0], sizes = [8, 32], strides = [1, 1]} : vector<8x96xf32> to vector<8x32xf32>
    %80 = vector.extract_strided_slice %76 {offsets = [0, 32], sizes = [8, 32], strides = [1, 1]} : vector<8x96xf32> to vector<8x32xf32>
    %81 = vector.extract_strided_slice %76 {offsets = [0, 64], sizes = [8, 32], strides = [1, 1]} : vector<8x96xf32> to vector<8x32xf32>
    %82 = arith.mulf %80, %63 : vector<8x32xf32>
    %83 = arith.mulf %79, %78 : vector<8x32xf32>
    %84 = arith.addf %82, %83 : vector<8x32xf32>
    %85 = math.tanh %84 : vector<8x32xf32>
    %86 = arith.mulf %81, %85 : vector<8x32xf32>
    %c0_36 = arith.constant 0 : index
    %c32 = arith.constant 32 : index
    %87 = vector.load %arg4[%c0_36, %c32] : memref<8x256xf32, #tpu.memory_space<vmem>>, vector<8x32xf32>
    tpu.vector_store %arg4[%c0_36, %c32], %86 {strides = array<i32>} : memref<8x256xf32, #tpu.memory_space<vmem>>, vector<8x32xf32>,
    %cst_37 = arith.constant dense<0.000000e+00> : vector<8x128xf32>
    %88 = tpu.matmul %86, %43, %cst_37 {dimension_numbers = #tpu.dot_dimension_numbers<[1], [0], [0], [1], [0, 0, 1, 1], [], []>} : vector<8x32xf32>, vector<32x128xf32>, vector<8x128xf32> -> vector<8x128xf32>
    %c2_38 = arith.constant 2 : index
    %c0_39 = arith.constant 0 : index
    %c0_40 = arith.constant 0 : index
    %89 = vector.load %arg5[%c2_38, %c0_39, %c0_40] : memref<8x8x128xf32, #tpu.memory_space<vmem>>, vector<1x8x128xf32>
    %90 = vector.shape_cast %89 : vector<1x8x128xf32> to vector<8x128xf32>
    %91 = arith.addf %88, %90 : vector<8x128xf32>
    %92 = vector.extract_strided_slice %91 {offsets = [0, 0], sizes = [8, 96], strides = [1, 1]} : vector<8x128xf32> to vector<8x96xf32>
    %93 = arith.negf %92 : vector<8x96xf32>
    %94 = math.exp %93 : vector<8x96xf32>
    %cst_41 = arith.constant 1.000000e+00 : f32
    %95 = vector.broadcast %cst_41 : f32 to vector<8x96xf32>
    %96 = arith.addf %95, %94 : vector<8x96xf32>
    %97 = arith.divf %95, %96 : vector<8x96xf32>
    %98 = vector.extract_strided_slice %91 {offsets = [0, 96], sizes = [8, 32], strides = [1, 1]} : vector<8x128xf32> to vector<8x32xf32>
    %99 = math.tanh %98 : vector<8x32xf32>
    %100 = vector.extract_strided_slice %97 {offsets = [0, 0], sizes = [8, 32], strides = [1, 1]} : vector<8x96xf32> to vector<8x32xf32>
    %101 = vector.extract_strided_slice %97 {offsets = [0, 32], sizes = [8, 32], strides = [1, 1]} : vector<8x96xf32> to vector<8x32xf32>
    %102 = vector.extract_strided_slice %97 {offsets = [0, 64], sizes = [8, 32], strides = [1, 1]} : vector<8x96xf32> to vector<8x32xf32>
    %103 = arith.mulf %101, %84 : vector<8x32xf32>
    %104 = arith.mulf %100, %99 : vector<8x32xf32>
    %105 = arith.addf %103, %104 : vector<8x32xf32>
    %106 = math.tanh %105 : vector<8x32xf32>
    %107 = arith.mulf %102, %106 : vector<8x32xf32>
    %c0_42 = arith.constant 0 : index
    %c64 = arith.constant 64 : index
    %108 = vector.load %arg4[%c0_42, %c64] : memref<8x256xf32, #tpu.memory_space<vmem>>, vector<8x32xf32>
    tpu.vector_store %arg4[%c0_42, %c64], %107 {strides = array<i32>} : memref<8x256xf32, #tpu.memory_space<vmem>>, vector<8x32xf32>,
    %cst_43 = arith.constant dense<0.000000e+00> : vector<8x128xf32>
    %109 = tpu.matmul %107, %43, %cst_43 {dimension_numbers = #tpu.dot_dimension_numbers<[1], [0], [0], [1], [0, 0, 1, 1], [], []>} : vector<8x32xf32>, vector<32x128xf32>, vector<8x128xf32> -> vector<8x128xf32>
    %c3_44 = arith.constant 3 : index
    %c0_45 = arith.constant 0 : index
    %c0_46 = arith.constant 0 : index
    %110 = vector.load %arg5[%c3_44, %c0_45, %c0_46] : memref<8x8x128xf32, #tpu.memory_space<vmem>>, vector<1x8x128xf32>
    %111 = vector.shape_cast %110 : vector<1x8x128xf32> to vector<8x128xf32>
    %112 = arith.addf %109, %111 : vector<8x128xf32>
    %113 = vector.extract_strided_slice %112 {offsets = [0, 0], sizes = [8, 96], strides = [1, 1]} : vector<8x128xf32> to vector<8x96xf32>
    %114 = arith.negf %113 : vector<8x96xf32>
    %115 = math.exp %114 : vector<8x96xf32>
    %cst_47 = arith.constant 1.000000e+00 : f32
    %116 = vector.broadcast %cst_47 : f32 to vector<8x96xf32>
    %117 = arith.addf %116, %115 : vector<8x96xf32>
    %118 = arith.divf %116, %117 : vector<8x96xf32>
    %119 = vector.extract_strided_slice %112 {offsets = [0, 96], sizes = [8, 32], strides = [1, 1]} : vector<8x128xf32> to vector<8x32xf32>
    %120 = math.tanh %119 : vector<8x32xf32>
    %121 = vector.extract_strided_slice %118 {offsets = [0, 0], sizes = [8, 32], strides = [1, 1]} : vector<8x96xf32> to vector<8x32xf32>
    %122 = vector.extract_strided_slice %118 {offsets = [0, 32], sizes = [8, 32], strides = [1, 1]} : vector<8x96xf32> to vector<8x32xf32>
    %123 = vector.extract_strided_slice %118 {offsets = [0, 64], sizes = [8, 32], strides = [1, 1]} : vector<8x96xf32> to vector<8x32xf32>
    %124 = arith.mulf %122, %105 : vector<8x32xf32>
    %125 = arith.mulf %121, %120 : vector<8x32xf32>
    %126 = arith.addf %124, %125 : vector<8x32xf32>
    %127 = math.tanh %126 : vector<8x32xf32>
    %128 = arith.mulf %123, %127 : vector<8x32xf32>
    %c0_48 = arith.constant 0 : index
    %c96 = arith.constant 96 : index
    %129 = vector.load %arg4[%c0_48, %c96] : memref<8x256xf32, #tpu.memory_space<vmem>>, vector<8x32xf32>
    tpu.vector_store %arg4[%c0_48, %c96], %128 {strides = array<i32>} : memref<8x256xf32, #tpu.memory_space<vmem>>, vector<8x32xf32>,
    %cst_49 = arith.constant dense<0.000000e+00> : vector<8x128xf32>
    %130 = tpu.matmul %128, %43, %cst_49 {dimension_numbers = #tpu.dot_dimension_numbers<[1], [0], [0], [1], [0, 0, 1, 1], [], []>} : vector<8x32xf32>, vector<32x128xf32>, vector<8x128xf32> -> vector<8x128xf32>
    %c4_50 = arith.constant 4 : index
    %c0_51 = arith.constant 0 : index
    %c0_52 = arith.constant 0 : index
    %131 = vector.load %arg5[%c4_50, %c0_51, %c0_52] : memref<8x8x128xf32, #tpu.memory_space<vmem>>, vector<1x8x128xf32>
    %132 = vector.shape_cast %131 : vector<1x8x128xf32> to vector<8x128xf32>
    %133 = arith.addf %130, %132 : vector<8x128xf32>
    %134 = vector.extract_strided_slice %133 {offsets = [0, 0], sizes = [8, 96], strides = [1, 1]} : vector<8x128xf32> to vector<8x96xf32>
    %135 = arith.negf %134 : vector<8x96xf32>
    %136 = math.exp %135 : vector<8x96xf32>
    %cst_53 = arith.constant 1.000000e+00 : f32
    %137 = vector.broadcast %cst_53 : f32 to vector<8x96xf32>
    %138 = arith.addf %137, %136 : vector<8x96xf32>
    %139 = arith.divf %137, %138 : vector<8x96xf32>
    %140 = vector.extract_strided_slice %133 {offsets = [0, 96], sizes = [8, 32], strides = [1, 1]} : vector<8x128xf32> to vector<8x32xf32>
    %141 = math.tanh %140 : vector<8x32xf32>
    %142 = vector.extract_strided_slice %139 {offsets = [0, 0], sizes = [8, 32], strides = [1, 1]} : vector<8x96xf32> to vector<8x32xf32>
    %143 = vector.extract_strided_slice %139 {offsets = [0, 32], sizes = [8, 32], strides = [1, 1]} : vector<8x96xf32> to vector<8x32xf32>
    %144 = vector.extract_strided_slice %139 {offsets = [0, 64], sizes = [8, 32], strides = [1, 1]} : vector<8x96xf32> to vector<8x32xf32>
    %145 = arith.mulf %143, %126 : vector<8x32xf32>
    %146 = arith.mulf %142, %141 : vector<8x32xf32>
    %147 = arith.addf %145, %146 : vector<8x32xf32>
    %148 = math.tanh %147 : vector<8x32xf32>
    %149 = arith.mulf %144, %148 : vector<8x32xf32>
    %c0_54 = arith.constant 0 : index
    %c128 = arith.constant 128 : index
    %150 = vector.load %arg4[%c0_54, %c128] : memref<8x256xf32, #tpu.memory_space<vmem>>, vector<8x32xf32>
    tpu.vector_store %arg4[%c0_54, %c128], %149 {strides = array<i32>} : memref<8x256xf32, #tpu.memory_space<vmem>>, vector<8x32xf32>,
    %cst_55 = arith.constant dense<0.000000e+00> : vector<8x128xf32>
    %151 = tpu.matmul %149, %43, %cst_55 {dimension_numbers = #tpu.dot_dimension_numbers<[1], [0], [0], [1], [0, 0, 1, 1], [], []>} : vector<8x32xf32>, vector<32x128xf32>, vector<8x128xf32> -> vector<8x128xf32>
    %c5_56 = arith.constant 5 : index
    %c0_57 = arith.constant 0 : index
    %c0_58 = arith.constant 0 : index
    %152 = vector.load %arg5[%c5_56, %c0_57, %c0_58] : memref<8x8x128xf32, #tpu.memory_space<vmem>>, vector<1x8x128xf32>
    %153 = vector.shape_cast %152 : vector<1x8x128xf32> to vector<8x128xf32>
    %154 = arith.addf %151, %153 : vector<8x128xf32>
    %155 = vector.extract_strided_slice %154 {offsets = [0, 0], sizes = [8, 96], strides = [1, 1]} : vector<8x128xf32> to vector<8x96xf32>
    %156 = arith.negf %155 : vector<8x96xf32>
    %157 = math.exp %156 : vector<8x96xf32>
    %cst_59 = arith.constant 1.000000e+00 : f32
    %158 = vector.broadcast %cst_59 : f32 to vector<8x96xf32>
    %159 = arith.addf %158, %157 : vector<8x96xf32>
    %160 = arith.divf %158, %159 : vector<8x96xf32>
    %161 = vector.extract_strided_slice %154 {offsets = [0, 96], sizes = [8, 32], strides = [1, 1]} : vector<8x128xf32> to vector<8x32xf32>
    %162 = math.tanh %161 : vector<8x32xf32>
    %163 = vector.extract_strided_slice %160 {offsets = [0, 0], sizes = [8, 32], strides = [1, 1]} : vector<8x96xf32> to vector<8x32xf32>
    %164 = vector.extract_strided_slice %160 {offsets = [0, 32], sizes = [8, 32], strides = [1, 1]} : vector<8x96xf32> to vector<8x32xf32>
    %165 = vector.extract_strided_slice %160 {offsets = [0, 64], sizes = [8, 32], strides = [1, 1]} : vector<8x96xf32> to vector<8x32xf32>
    %166 = arith.mulf %164, %147 : vector<8x32xf32>
    %167 = arith.mulf %163, %162 : vector<8x32xf32>
    %168 = arith.addf %166, %167 : vector<8x32xf32>
    %169 = math.tanh %168 : vector<8x32xf32>
    %170 = arith.mulf %165, %169 : vector<8x32xf32>
    %c0_60 = arith.constant 0 : index
    %c160 = arith.constant 160 : index
    %171 = vector.load %arg4[%c0_60, %c160] : memref<8x256xf32, #tpu.memory_space<vmem>>, vector<8x32xf32>
    tpu.vector_store %arg4[%c0_60, %c160], %170 {strides = array<i32>} : memref<8x256xf32, #tpu.memory_space<vmem>>, vector<8x32xf32>,
    %cst_61 = arith.constant dense<0.000000e+00> : vector<8x128xf32>
    %172 = tpu.matmul %170, %43, %cst_61 {dimension_numbers = #tpu.dot_dimension_numbers<[1], [0], [0], [1], [0, 0, 1, 1], [], []>} : vector<8x32xf32>, vector<32x128xf32>, vector<8x128xf32> -> vector<8x128xf32>
    %c6_62 = arith.constant 6 : index
    %c0_63 = arith.constant 0 : index
    %c0_64 = arith.constant 0 : index
    %173 = vector.load %arg5[%c6_62, %c0_63, %c0_64] : memref<8x8x128xf32, #tpu.memory_space<vmem>>, vector<1x8x128xf32>
    %174 = vector.shape_cast %173 : vector<1x8x128xf32> to vector<8x128xf32>
    %175 = arith.addf %172, %174 : vector<8x128xf32>
    %176 = vector.extract_strided_slice %175 {offsets = [0, 0], sizes = [8, 96], strides = [1, 1]} : vector<8x128xf32> to vector<8x96xf32>
    %177 = arith.negf %176 : vector<8x96xf32>
    %178 = math.exp %177 : vector<8x96xf32>
    %cst_65 = arith.constant 1.000000e+00 : f32
    %179 = vector.broadcast %cst_65 : f32 to vector<8x96xf32>
    %180 = arith.addf %179, %178 : vector<8x96xf32>
    %181 = arith.divf %179, %180 : vector<8x96xf32>
    %182 = vector.extract_strided_slice %175 {offsets = [0, 96], sizes = [8, 32], strides = [1, 1]} : vector<8x128xf32> to vector<8x32xf32>
    %183 = math.tanh %182 : vector<8x32xf32>
    %184 = vector.extract_strided_slice %181 {offsets = [0, 0], sizes = [8, 32], strides = [1, 1]} : vector<8x96xf32> to vector<8x32xf32>
    %185 = vector.extract_strided_slice %181 {offsets = [0, 32], sizes = [8, 32], strides = [1, 1]} : vector<8x96xf32> to vector<8x32xf32>
    %186 = vector.extract_strided_slice %181 {offsets = [0, 64], sizes = [8, 32], strides = [1, 1]} : vector<8x96xf32> to vector<8x32xf32>
    %187 = arith.mulf %185, %168 : vector<8x32xf32>
    %188 = arith.mulf %184, %183 : vector<8x32xf32>
    %189 = arith.addf %187, %188 : vector<8x32xf32>
    %190 = math.tanh %189 : vector<8x32xf32>
    %191 = arith.mulf %186, %190 : vector<8x32xf32>
    %c0_66 = arith.constant 0 : index
    %c192 = arith.constant 192 : index
    %192 = vector.load %arg4[%c0_66, %c192] : memref<8x256xf32, #tpu.memory_space<vmem>>, vector<8x32xf32>
    tpu.vector_store %arg4[%c0_66, %c192], %191 {strides = array<i32>} : memref<8x256xf32, #tpu.memory_space<vmem>>, vector<8x32xf32>,
    %cst_67 = arith.constant dense<0.000000e+00> : vector<8x128xf32>
    %193 = tpu.matmul %191, %43, %cst_67 {dimension_numbers = #tpu.dot_dimension_numbers<[1], [0], [0], [1], [0, 0, 1, 1], [], []>} : vector<8x32xf32>, vector<32x128xf32>, vector<8x128xf32> -> vector<8x128xf32>
    %c7_68 = arith.constant 7 : index
    %c0_69 = arith.constant 0 : index
    %c0_70 = arith.constant 0 : index
    %194 = vector.load %arg5[%c7_68, %c0_69, %c0_70] : memref<8x8x128xf32, #tpu.memory_space<vmem>>, vector<1x8x128xf32>
    %195 = vector.shape_cast %194 : vector<1x8x128xf32> to vector<8x128xf32>
    %196 = arith.addf %193, %195 : vector<8x128xf32>
    %197 = vector.extract_strided_slice %196 {offsets = [0, 0], sizes = [8, 96], strides = [1, 1]} : vector<8x128xf32> to vector<8x96xf32>
    %198 = arith.negf %197 : vector<8x96xf32>
    %199 = math.exp %198 : vector<8x96xf32>
    %cst_71 = arith.constant 1.000000e+00 : f32
    %200 = vector.broadcast %cst_71 : f32 to vector<8x96xf32>
    %201 = arith.addf %200, %199 : vector<8x96xf32>
    %202 = arith.divf %200, %201 : vector<8x96xf32>
    %203 = vector.extract_strided_slice %196 {offsets = [0, 96], sizes = [8, 32], strides = [1, 1]} : vector<8x128xf32> to vector<8x32xf32>
    %204 = math.tanh %203 : vector<8x32xf32>
    %205 = vector.extract_strided_slice %202 {offsets = [0, 0], sizes = [8, 32], strides = [1, 1]} : vector<8x96xf32> to vector<8x32xf32>
    %206 = vector.extract_strided_slice %202 {offsets = [0, 32], sizes = [8, 32], strides = [1, 1]} : vector<8x96xf32> to vector<8x32xf32>
    %207 = vector.extract_strided_slice %202 {offsets = [0, 64], sizes = [8, 32], strides = [1, 1]} : vector<8x96xf32> to vector<8x32xf32>
    %208 = arith.mulf %206, %189 : vector<8x32xf32>
    %209 = arith.mulf %205, %204 : vector<8x32xf32>
    %210 = arith.addf %208, %209 : vector<8x32xf32>
    %211 = math.tanh %210 : vector<8x32xf32>
    %212 = arith.mulf %207, %211 : vector<8x32xf32>
    %c0_72 = arith.constant 0 : index
    %c224 = arith.constant 224 : index
    %213 = vector.load %arg4[%c0_72, %c224] : memref<8x256xf32, #tpu.memory_space<vmem>>, vector<8x32xf32>
    tpu.vector_store %arg4[%c0_72, %c224], %212 {strides = array<i32>} : memref<8x256xf32, #tpu.memory_space<vmem>>, vector<8x32xf32>,
    %c0_73 = arith.constant 0 : index
    %c0_74 = arith.constant 0 : index
    %214 = vector.load %arg3[%c0_73, %c0_74] : memref<8x32xf32, #tpu.memory_space<vmem>>, vector<8x32xf32>
    tpu.vector_store %arg3[%c0_73, %c0_74], %212 {strides = array<i32>} : memref<8x32xf32, #tpu.memory_space<vmem>>, vector<8x32xf32>,
    return
  }
}

</mosaic_0001>

<llo_original>
// kernel: step_selector_encoder.1
$region0: #{step_selector_encoder.1}
  #allocation0 [shape = 'u32[]', space=smem, size = 0x4, offset = 0x4, fixed_abs, tag = 'smem constant byte address 0x4 - core index']
  #allocation1 [shape = 'u32[144,128]{1,0:T(1,128)}', space=vmem, size = 0x12000, scoped, tag = 'internal scratch']
  #allocation2 [shape = 'f32[8,8,128]{2,1,0:T(8,128)}', space=vmem, size = 0x8000, scoped, tag = 'scratch operand']
  %s0 = inlined_call_operand.vmem [shape: s32[64,1], index: 0, kind: input, shape index: {}]
  %s1 = inlined_call_operand.vmem [shape: f32[17,128], index: 1, kind: input, shape index: {}]
  %s2 = inlined_call_operand.vmem [shape: f32[32,128], index: 2, kind: input, shape index: {}]
  %s3 = inlined_call_operand.vmem [shape: f32[8,32], index: 3, kind: output, shape index: {0}]
  %s4 = inlined_call_operand.vmem [shape: f32[8,256], index: 4, kind: output, shape index: {1}]
  %5 = xla_tuple %s3, %s4
  %s6 = sld [smem:[#allocation0]]
  $region30: #{step_selector_encoder.1} parent=0
    _
  %s8 = ssub.s32 1, %s6
  %s9 = scalar_select 0, %s8, %s6
  // Predicated region
  $region2: #{step_selector_encoder.1} parent=0 // pred_check
    _
  $region3: #{step_selector_encoder.1} parent=0 // pred_check_branch
    %11 = sbr.rel (0) target = $region5
  $region4: #{step_selector_encoder.1} parent=0 // pred_region
    _
  $region5: #{step_selector_encoder.1} parent=0 // pred_fallthru
    _
  // Predicated region
  $region6: #{step_selector_encoder.1} parent=0 // pred_check
    _
  $region7: #{step_selector_encoder.1} parent=0 // pred_check_branch
    %13 = sbr.rel (0) target = $region9
  $region8: #{step_selector_encoder.1} parent=0 // pred_region
    _
  $region9: #{step_selector_encoder.1} parent=0 // pred_fallthru
    _
  // Predicated region
  $region10: #{step_selector_encoder.1} parent=0 // pred_check
    _
  $region11: #{step_selector_encoder.1} parent=0 // pred_check_branch
    %15 = sbr.rel (0) target = $region13
  $region12: #{step_selector_encoder.1} parent=0 // pred_region
    _
  $region13: #{step_selector_encoder.1} parent=0 // pred_fallthru
    _
  %v16 = vld [vmem:[%s0] sm:$0xff]
  %v17 = vld [vmem:[%s0 + $0x8] sm:$0xff]
  %v18 = vld [vmem:[%s0 + $0x10] sm:$0xff]
  %v19 = vld [vmem:[%s0 + $0x18] sm:$0xff]
  %v20 = vld [vmem:[%s0 + $0x20] sm:$0xff]
  %v21 = vld [vmem:[%s0 + $0x28] sm:$0xff]
  %v22 = vld [vmem:[%s0 + $0x30] sm:$0xff]
  %v23 = vld [vmem:[%s0 + $0x38] sm:$0xff]
  %v24 = vlaneseq
  %v25 = vand.u32 %v24, 127
  %26 = vset.pattern.permute.xlu0 0
  %27 = vperm.xlu0 %26, %v16
  %v28 = vpop.permute.xlu0 %27
  %29 = vset.pattern.permute.xlu0 0
  %30 = vperm.xlu0 %29, %v17
  %v31 = vpop.permute.xlu0 %30
  %32 = vset.pattern.permute.xlu0 0
  %33 = vperm.xlu0 %32, %v18
  %v34 = vpop.permute.xlu0 %33
  %35 = vset.pattern.permute.xlu0 0
  %36 = vperm.xlu0 %35, %v19
  %v37 = vpop.permute.xlu0 %36
  %38 = vset.pattern.permute.xlu0 0
  %39 = vperm.xlu0 %38, %v20
  %v40 = vpop.permute.xlu0 %39
  %41 = vset.pattern.permute.xlu0 0
  %42 = vperm.xlu0 %41, %v21
  %v43 = vpop.permute.xlu0 %42
  %44 = vset.pattern.permute.xlu0 0
  %45 = vperm.xlu0 %44, %v22
  %v46 = vpop.permute.xlu0 %45
  %47 = vset.pattern.permute.xlu0 0
  %48 = vperm.xlu0 %47, %v23
  %v49 = vpop.permute.xlu0 %48
  %vm50 = vcmp.eq.s32.totalorder %v28, %v25
  %vm51 = vcmp.eq.s32.totalorder %v31, %v25
  %vm52 = vcmp.eq.s32.totalorder %v34, %v25
  %vm53 = vcmp.eq.s32.totalorder %v37, %v25
  %vm54 = vcmp.eq.s32.totalorder %v40, %v25
  %vm55 = vcmp.eq.s32.totalorder %v43, %v25
  %vm56 = vcmp.eq.s32.totalorder %v46, %v25
  %vm57 = vcmp.eq.s32.totalorder %v49, %v25
  %vm58 = vcmp.eq.s32.totalorder %v25, 16
  %vm59 = vmor %vm50, %vm58
  %vm60 = vmor %vm51, %vm58
  %vm61 = vmor %vm52, %vm58
  %vm62 = vmor %vm53, %vm58
  %vm63 = vmor %vm54, %vm58
  %vm64 = vmor %vm55, %vm58
  %vm65 = vmor %vm56, %vm58
  %vm66 = vmor %vm57, %vm58
  %v67 = vsel %vm59, 1, 0
  %v68 = vsel %vm60, 1, 0
  %v69 = vsel %vm61, 1, 0
  %v70 = vsel %vm62, 1, 0
  %v71 = vsel %vm63, 1, 0
  %v72 = vsel %vm64, 1, 0
  %v73 = vsel %vm65, 1, 0
  %v74 = vsel %vm66, 1, 0
  %v75 = vcvt.s32.f32 %v67
  %v76 = vcvt.s32.f32 %v68
  %v77 = vcvt.s32.f32 %v69
  %v78 = vcvt.s32.f32 %v70
  %v79 = vcvt.s32.f32 %v71
  %v80 = vcvt.s32.f32 %v72
  %v81 = vcvt.s32.f32 %v73
  %v82 = vcvt.s32.f32 %v74
  %v83 = vld [vmem:[%s1] sm:$0xff]
  %v84 = vld [vmem:[%s1 + $0x8] sm:$0xff]
  %v85 = vld [vmem:[%s1 + $0x10] sm:$0x1]
  %vm86 = vcmask 138240
  %v88 = vsel %vm86, %v75, 0
  %v91 = vsel %vm86, %v76, 0
  %v94 = vsel %vm86, %v77, 0
  %v97 = vsel %vm86, %v78, 0
  %v100 = vsel %vm86, %v79, 0
  %v103 = vsel %vm86, %v80, 0
  %v106 = vsel %vm86, %v81, 0
  %v109 = vsel %vm86, %v82, 0
  %vm111 = vcmask 1040384
  %v113 = vsel %vm111, %v85, 0
  %115 = vmatprep.subr.mxu0 0.0
  %116 = vmatpush1.msra.mxu0 0.0
  %117 = vmatprep.subr.mxu0 0.0
  %118 = vmatpush1.msra.mxu0 0.0
  %119 = vmatprep.subr.mxu0 0.0
  %120 = vmatpush1.msra.mxu0 0.0
  %121 = vmatprep.subr.mxu0 0.0
  %122 = vmatpush1.msra.mxu0 0.0
  %123 = vmatprep.subr.mxu0 0.0
  %124 = vmatpush1.msra.mxu0 0.0
  %125 = vmatprep.subr.mxu0 0.0
  %126 = vmatpush1.msra.mxu0 0.0
  %127 = vmatprep.subr.mxu0 0.0
  %128 = vmatpush1.msra.mxu0 0.0
  %129 = vmatprep.subr.mxu0 0.0
  %130 = vmatpush1.msra.mxu0 0.0
  %131 = vmatprep.subr.mxu0 0.0
  %132 = vmatpush1.msra.mxu0 0.0
  %133 = vmatprep.subr.mxu0 0.0
  %134 = vmatpush1.msra.mxu0 0.0
  %135 = vmatprep.subr.mxu0 0.0
  %136 = vmatpush1.msra.mxu0 0.0
  %137 = vmatprep.subr.mxu0 0.0
  %138 = vmatpush1.msra.mxu0 0.0
  %139 = vmatprep.subr.mxu0 0.0
  %140 = vmatpush1.msra.mxu0 0.0
  %141 = vmatprep.subr.mxu0 0.0
  %142 = vmatpush1.msra.mxu0 %v113
  %143 = vmatprep.subr.mxu0 0.0
  %144 = vmatpush1.msra.mxu0 %v84
  %145 = vmatprep.subr.mxu0 0.0
  %146 = vmatpush1.msra.mxu0 %v83
  %147 = vmatprep.subr.mxu0 0.0
  %148 = vmatpush2.msra.mxu0 0.0
  %149 = vmatprep.subr.mxu0 0.0
  %150 = vmatpush2.msra.mxu0 0.0
  %151 = vmatprep.subr.mxu0 0.0
  %152 = vmatpush2.msra.mxu0 0.0
  %153 = vmatprep.subr.mxu0 0.0
  %154 = vmatpush2.msra.mxu0 0.0
  %155 = vmatprep.subr.mxu0 0.0
  %156 = vmatpush2.msra.mxu0 0.0
  %157 = vmatprep.subr.mxu0 0.0
  %158 = vmatpush2.msra.mxu0 0.0
  %159 = vmatprep.subr.mxu0 0.0
  %160 = vmatpush2.msra.mxu0 0.0
  %161 = vmatprep.subr.mxu0 0.0
  %162 = vmatpush2.msra.mxu0 0.0
  %163 = vmatprep.subr.mxu0 0.0
  %164 = vmatpush2.msra.mxu0 0.0
  %165 = vmatprep.subr.mxu0 0.0
  %166 = vmatpush2.msra.mxu0 0.0
  %167 = vmatprep.subr.mxu0 0.0
  %168 = vmatpush2.msra.mxu0 0.0
  %169 = vmatprep.subr.mxu0 0.0
  %170 = vmatpush2.msra.mxu0 0.0
  %171 = vmatprep.subr.mxu0 0.0
  %172 = vmatpush2.msra.mxu0 0.0
  %173 = vmatprep.subr.mxu0 0.0
  %174 = vmatpush2.msra.mxu0 0.0
  %175 = vmatprep.subr.mxu0 0.0
  %176 = vmatpush2.msra.mxu0 0.0
  %177 = vmatprep.subr.mxu0 0.0
  %178 = vmatpush2.msra.mxu0 0.0
  %179 = vmatprep.mubr.f32.mxu0 0.0
  %180 = vmatmul.mubr.f32.gmra.mxu0 %v88
  %v181 = vpop.f32.mrf.mxu0
  %v182 = vadd.f32 0.0, %v181
  %v183 = vpop.f32.mrf.mxu0
  %184 = vmatprep.mubr.f32.mxu0 0.0
  %185 = vmatmul.mubr.f32.gmra.mxu0 %v91
  %v186 = vpop.f32.mrf.mxu0
  %v187 = vadd.f32 0.0, %v186
  %v188 = vpop.f32.mrf.mxu0
  %189 = vmatprep.mubr.f32.mxu0 0.0
  %190 = vmatmul.mubr.f32.gmra.mxu0 %v94
  %v191 = vpop.f32.mrf.mxu0
  %v192 = vadd.f32 0.0, %v191
  %v193 = vpop.f32.mrf.mxu0
  %194 = vmatprep.mubr.f32.mxu0 0.0
  %195 = vmatmul.mubr.f32.gmra.mxu0 %v97
  %v196 = vpop.f32.mrf.mxu0
  %v197 = vadd.f32 0.0, %v196
  %v198 = vpop.f32.mrf.mxu0
  %199 = vmatprep.mubr.f32.mxu0 0.0
  %200 = vmatmul.mubr.f32.gmra.mxu0 %v100
  %v201 = vpop.f32.mrf.mxu0
  %v202 = vadd.f32 0.0, %v201
  %v203 = vpop.f32.mrf.mxu0
  %204 = vmatprep.mubr.f32.mxu0 0.0
  %205 = vmatmul.mubr.f32.gmra.mxu0 %v103
  %v206 = vpop.f32.mrf.mxu0
  %v207 = vadd.f32 0.0, %v206
  %v208 = vpop.f32.mrf.mxu0
  %209 = vmatprep.mubr.f32.mxu0 0.0
  %210 = vmatmul.mubr.f32.gmra.mxu0 %v106
  %v211 = vpop.f32.mrf.mxu0
  %v212 = vadd.f32 0.0, %v211
  %v213 = vpop.f32.mrf.mxu0
  %214 = vmatprep.mubr.f32.mxu0 0.0
  %215 = vmatmul.mubr.f32.gmra.mxu0 %v109
  %v216 = vpop.f32.mrf.mxu0
  %v217 = vadd.f32 0.0, %v216
  %v218 = vpop.f32.mrf.mxu0
  %219 = vdwg.mxu0
  %220 = vst [vmem:[#allocation2] sm:$0xff] %v182
  %s221 = scalar_lea.vmem [#allocation2], 8
  %222 = vst [vmem:[%s221] sm:$0xff] %v187
  %s223 = scalar_lea.vmem [#allocation2], 16
  %224 = vst [vmem:[%s223] sm:$0xff] %v192
  %s225 = scalar_lea.vmem [#allocation2], 24
  %226 = vst [vmem:[%s225] sm:$0xff] %v197
  %s227 = scalar_lea.vmem [#allocation2], 32
  %228 = vst [vmem:[%s227] sm:$0xff] %v202
  %s229 = scalar_lea.vmem [#allocation2], 40
  %230 = vst [vmem:[%s229] sm:$0xff] %v207
  %s231 = scalar_lea.vmem [#allocation2], 48
  %232 = vst [vmem:[%s231] sm:$0xff] %v212
  %s233 = scalar_lea.vmem [#allocation2], 56
  %234 = vst [vmem:[%s233] sm:$0xff] %v217
  %v235 = vld [vmem:[%s2] sm:$0xff]
  %v236 = vld [vmem:[%s2 + $0x8] sm:$0xff]
  %v237 = vld [vmem:[%s2 + $0x10] sm:$0xff]
  %v238 = vld [vmem:[%s2 + $0x18] sm:$0xff]
  %v239 = vld [vmem:[#allocation2] sm:$0xff]
  %vm240 = vcmask 261120
  %v242 = vsel %vm240, 0.0, 0
  %244 = vmatprep.subr.mxu0 0.0
  %245 = vmatpush1.msra.mxu0 0.0
  %246 = vmatprep.subr.mxu0 0.0
  %247 = vmatpush1.msra.mxu0 0.0
  %248 = vmatprep.subr.mxu0 0.0
  %249 = vmatpush1.msra.mxu0 0.0
  %250 = vmatprep.subr.mxu0 0.0
  %251 = vmatpush1.msra.mxu0 0.0
  %252 = vmatprep.subr.mxu0 0.0
  %253 = vmatpush1.msra.mxu0 0.0
  %254 = vmatprep.subr.mxu0 0.0
  %255 = vmatpush1.msra.mxu0 0.0
  %256 = vmatprep.subr.mxu0 0.0
  %257 = vmatpush1.msra.mxu0 0.0
  %258 = vmatprep.subr.mxu0 0.0
  %259 = vmatpush1.msra.mxu0 0.0
  %260 = vmatprep.subr.mxu0 0.0
  %261 = vmatpush1.msra.mxu0 0.0
  %262 = vmatprep.subr.mxu0 0.0
  %263 = vmatpush1.msra.mxu0 0.0
  %264 = vmatprep.subr.mxu0 0.0
  %265 = vmatpush1.msra.mxu0 0.0
  %266 = vmatprep.subr.mxu0 0.0
  %267 = vmatpush1.msra.mxu0 0.0
  %268 = vmatprep.subr.mxu0 0.0
  %269 = vmatpush1.msra.mxu0 %v238
  %270 = vmatprep.subr.mxu0 0.0
  %271 = vmatpush1.msra.mxu0 %v237
  %272 = vmatprep.subr.mxu0 0.0
  %273 = vmatpush1.msra.mxu0 %v236
  %274 = vmatprep.subr.mxu0 0.0
  %275 = vmatpush1.msra.mxu0 %v235
  %276 = vmatprep.subr.mxu0 0.0
  %277 = vmatpush2.msra.mxu0 0.0
  %278 = vmatprep.subr.mxu0 0.0
  %279 = vmatpush2.msra.mxu0 0.0
  %280 = vmatprep.subr.mxu0 0.0
  %281 = vmatpush2.msra.mxu0 0.0
  %282 = vmatprep.subr.mxu0 0.0
  %283 = vmatpush2.msra.mxu0 0.0
  %284 = vmatprep.subr.mxu0 0.0
  %285 = vmatpush2.msra.mxu0 0.0
  %286 = vmatprep.subr.mxu0 0.0
  %287 = vmatpush2.msra.mxu0 0.0
  %288 = vmatprep.subr.mxu0 0.0
  %289 = vmatpush2.msra.mxu0 0.0
  %290 = vmatprep.subr.mxu0 0.0
  %291 = vmatpush2.msra.mxu0 0.0
  %292 = vmatprep.subr.mxu0 0.0
  %293 = vmatpush2.msra.mxu0 0.0
  %294 = vmatprep.subr.mxu0 0.0
  %295 = vmatpush2.msra.mxu0 0.0
  %296 = vmatprep.subr.mxu0 0.0
  %297 = vmatpush2.msra.mxu0 0.0
  %298 = vmatprep.subr.mxu0 0.0
  %299 = vmatpush2.msra.mxu0 0.0
  %300 = vmatprep.subr.mxu0 0.0
  %301 = vmatpush2.msra.mxu0 0.0
  %302 = vmatprep.subr.mxu0 0.0
  %303 = vmatpush2.msra.mxu0 0.0
  %304 = vmatprep.subr.mxu0 0.0
  %305 = vmatpush2.msra.mxu0 0.0
  %306 = vmatprep.subr.mxu0 0.0
  %307 = vmatpush2.msra.mxu0 0.0
  %308 = vmatprep.mubr.f32.mxu0 0.0
  %309 = vmatmul.mubr.f32.gmra.mxu0 %v242
  %v310 = vpop.f32.mrf.mxu0
  %v311 = vadd.f32 %v239, %v310
  %v312 = vpop.f32.mrf.mxu0
  %313 = vdwg.mxu0
  %v314 = vxor.u32 %v311, 2147483648
  %v315 = vmul.f32 %v314, 1.442695
  %v316 = vpow.pop %v315
  %v317 = vadd.f32 %v316, 1.0
  %v318 = vrcp.pop %v317
  %v319 = vmul.f32 1.0, %v318
  %v320 = vtanh.pop %v311
  %v321 = vmul.f32 %v319, 0.0
  %323 = vrot.lane.b32.xlu0 %v320, 32
  %v324 = vpop.permute.xlu0 %323
  %v326 = vmul.f32 %v319, %v324
  %328 = vrot.lane.b32.xlu0 %v326, 32
  %v329 = vpop.permute.xlu0 %328
  %v331 = vadd.f32 %v321, %v329
  %v332 = vtanh.pop %v331
  %334 = vrot.lane.b32.xlu0 %v332, 32
  %v335 = vpop.permute.xlu0 %334
  %v337 = vmul.f32 %v319, %v335
  %339 = vrot.lane.b32.xlu0 %v337, 64
  %v340 = vpop.permute.xlu0 %339
  %342 = vst.msk [vmem:[%s4] sm:$0xff] %vm240, %v340
  %v343 = vld [vmem:[%s221] sm:$0xff]
  %v344 = vsel %vm240, %v340, 0
  %346 = vmatprep.subr.mxu0 0.0
  %347 = vmatpush1.msra.mxu0 0.0
  %348 = vmatprep.subr.mxu0 0.0
  %349 = vmatpush1.msra.mxu0 0.0
  %350 = vmatprep.subr.mxu0 0.0
  %351 = vmatpush1.msra.mxu0 0.0
  %352 = vmatprep.subr.mxu0 0.0
  %353 = vmatpush1.msra.mxu0 0.0
  %354 = vmatprep.subr.mxu0 0.0
  %355 = vmatpush1.msra.mxu0 0.0
  %356 = vmatprep.subr.mxu0 0.0
  %357 = vmatpush1.msra.mxu0 0.0
  %358 = vmatprep.subr.mxu0 0.0
  %359 = vmatpush1.msra.mxu0 0.0
  %360 = vmatprep.subr.mxu0 0.0
  %361 = vmatpush1.msra.mxu0 0.0
  %362 = vmatprep.subr.mxu0 0.0
  %363 = vmatpush1.msra.mxu0 0.0
  %364 = vmatprep.subr.mxu0 0.0
  %365 = vmatpush1.msra.mxu0 0.0
  %366 = vmatprep.subr.mxu0 0.0
  %367 = vmatpush1.msra.mxu0 0.0
  %368 = vmatprep.subr.mxu0 0.0
  %369 = vmatpush1.msra.mxu0 0.0
  %370 = vmatprep.subr.mxu0 0.0
  %371 = vmatpush1.msra.mxu0 %v238
  %372 = vmatprep.subr.mxu0 0.0
  %373 = vmatpush1.msra.mxu0 %v237
  %374 = vmatprep.subr.mxu0 0.0
  %375 = vmatpush1.msra.mxu0 %v236
  %376 = vmatprep.subr.mxu0 0.0
  %377 = vmatpush1.msra.mxu0 %v235
  %378 = vmatprep.subr.mxu0 0.0
  %379 = vmatpush2.msra.mxu0 0.0
  %380 = vmatprep.subr.mxu0 0.0
  %381 = vmatpush2.msra.mxu0 0.0
  %382 = vmatprep.subr.mxu0 0.0
  %383 = vmatpush2.msra.mxu0 0.0
  %384 = vmatprep.subr.mxu0 0.0
  %385 = vmatpush2.msra.mxu0 0.0
  %386 = vmatprep.subr.mxu0 0.0
  %387 = vmatpush2.msra.mxu0 0.0
  %388 = vmatprep.subr.mxu0 0.0
  %389 = vmatpush2.msra.mxu0 0.0
  %390 = vmatprep.subr.mxu0 0.0
  %391 = vmatpush2.msra.mxu0 0.0
  %392 = vmatprep.subr.mxu0 0.0
  %393 = vmatpush2.msra.mxu0 0.0
  %394 = vmatprep.subr.mxu0 0.0
  %395 = vmatpush2.msra.mxu0 0.0
  %396 = vmatprep.subr.mxu0 0.0
  %397 = vmatpush2.msra.mxu0 0.0
  %398 = vmatprep.subr.mxu0 0.0
  %399 = vmatpush2.msra.mxu0 0.0
  %400 = vmatprep.subr.mxu0 0.0
  %401 = vmatpush2.msra.mxu0 0.0
  %402 = vmatprep.subr.mxu0 0.0
  %403 = vmatpush2.msra.mxu0 0.0
  %404 = vmatprep.subr.mxu0 0.0
  %405 = vmatpush2.msra.mxu0 0.0
  %406 = vmatprep.subr.mxu0 0.0
  %407 = vmatpush2.msra.mxu0 0.0
  %408 = vmatprep.subr.mxu0 0.0
  %409 = vmatpush2.msra.mxu0 0.0
  %410 = vmatprep.mubr.f32.mxu0 0.0
  %411 = vmatmul.mubr.f32.gmra.mxu0 %v344
  %v412 = vpop.f32.mrf.mxu0
  %v413 = vadd.f32 %v343, %v412
  %v414 = vpop.f32.mrf.mxu0
  %415 = vdwg.mxu0
  %v416 = vxor.u32 %v413, 2147483648
  %v417 = vmul.f32 %v416, 1.442695
  %v418 = vpow.pop %v417
  %v419 = vadd.f32 %v418, 1.0
  %v420 = vrcp.pop %v419
  %v421 = vmul.f32 1.0, %v420
  %v422 = vtanh.pop %v413
  %v423 = vmul.f32 %v421, %v331
  %425 = vrot.lane.b32.xlu0 %v422, 32
  %v426 = vpop.permute.xlu0 %425
  %v428 = vmul.f32 %v421, %v426
  %430 = vrot.lane.b32.xlu0 %v428, 32
  %v431 = vpop.permute.xlu0 %430
  %v433 = vadd.f32 %v423, %v431
  %v434 = vtanh.pop %v433
  %436 = vrot.lane.b32.xlu0 %v434, 32
  %v437 = vpop.permute.xlu0 %436
  %v439 = vmul.f32 %v421, %v437
  %441 = vrot.lane.b32.xlu0 %v439, 96
  %v442 = vpop.permute.xlu0 %441
  %vm444 = vcmask 523520
  %445 = vst.msk [vmem:[%s4] sm:$0xff] %vm444, %v442
  %v446 = vld [vmem:[%s223] sm:$0xff]
  %447 = vrot.lane.b32.xlu0 %v439, 64
  %v448 = vpop.permute.xlu0 %447
  %v449 = vsel %vm240, %v448, 0
  %451 = vmatprep.subr.mxu0 0.0
  %452 = vmatpush1.msra.mxu0 0.0
  %453 = vmatprep.subr.mxu0 0.0
  %454 = vmatpush1.msra.mxu0 0.0
  %455 = vmatprep.subr.mxu0 0.0
  %456 = vmatpush1.msra.mxu0 0.0
  %457 = vmatprep.subr.mxu0 0.0
  %458 = vmatpush1.msra.mxu0 0.0
  %459 = vmatprep.subr.mxu0 0.0
  %460 = vmatpush1.msra.mxu0 0.0
  %461 = vmatprep.subr.mxu0 0.0
  %462 = vmatpush1.msra.mxu0 0.0
  %463 = vmatprep.subr.mxu0 0.0
  %464 = vmatpush1.msra.mxu0 0.0
  %465 = vmatprep.subr.mxu0 0.0
  %466 = vmatpush1.msra.mxu0 0.0
  %467 = vmatprep.subr.mxu0 0.0
  %468 = vmatpush1.msra.mxu0 0.0
  %469 = vmatprep.subr.mxu0 0.0
  %470 = vmatpush1.msra.mxu0 0.0
  %471 = vmatprep.subr.mxu0 0.0
  %472 = vmatpush1.msra.mxu0 0.0
  %473 = vmatprep.subr.mxu0 0.0
  %474 = vmatpush1.msra.mxu0 0.0
  %475 = vmatprep.subr.mxu0 0.0
  %476 = vmatpush1.msra.mxu0 %v238
  %477 = vmatprep.subr.mxu0 0.0
  %478 = vmatpush1.msra.mxu0 %v237
  %479 = vmatprep.subr.mxu0 0.0
  %480 = vmatpush1.msra.mxu0 %v236
  %481 = vmatprep.subr.mxu0 0.0
  %482 = vmatpush1.msra.mxu0 %v235
  %483 = vmatprep.subr.mxu0 0.0
  %484 = vmatpush2.msra.mxu0 0.0
  %485 = vmatprep.subr.mxu0 0.0
  %486 = vmatpush2.msra.mxu0 0.0
  %487 = vmatprep.subr.mxu0 0.0
  %488 = vmatpush2.msra.mxu0 0.0
  %489 = vmatprep.subr.mxu0 0.0
  %490 = vmatpush2.msra.mxu0 0.0
  %491 = vmatprep.subr.mxu0 0.0
  %492 = vmatpush2.msra.mxu0 0.0
  %493 = vmatprep.subr.mxu0 0.0
  %494 = vmatpush2.msra.mxu0 0.0
  %495 = vmatprep.subr.mxu0 0.0
  %496 = vmatpush2.msra.mxu0 0.0
  %497 = vmatprep.subr.mxu0 0.0
  %498 = vmatpush2.msra.mxu0 0.0
  %499 = vmatprep.subr.mxu0 0.0
  %500 = vmatpush2.msra.mxu0 0.0
  %501 = vmatprep.subr.mxu0 0.0
  %502 = vmatpush2.msra.mxu0 0.0
  %503 = vmatprep.subr.mxu0 0.0
  %504 = vmatpush2.msra.mxu0 0.0
  %505 = vmatprep.subr.mxu0 0.0
  %506 = vmatpush2.msra.mxu0 0.0
  %507 = vmatprep.subr.mxu0 0.0
  %508 = vmatpush2.msra.mxu0 0.0
  %509 = vmatprep.subr.mxu0 0.0
  %510 = vmatpush2.msra.mxu0 0.0
  %511 = vmatprep.subr.mxu0 0.0
  %512 = vmatpush2.msra.mxu0 0.0
  %513 = vmatprep.subr.mxu0 0.0
  %514 = vmatpush2.msra.mxu0 0.0
  %515 = vmatprep.mubr.f32.mxu0 0.0
  %516 = vmatmul.mubr.f32.gmra.mxu0 %v449
  %v517 = vpop.f32.mrf.mxu0
  %v518 = vadd.f32 %v446, %v517
  %v519 = vpop.f32.mrf.mxu0
  %520 = vdwg.mxu0
  %v521 = vxor.u32 %v518, 2147483648
  %v522 = vmul.f32 %v521, 1.442695
  %v523 = vpow.pop %v522
  %v524 = vadd.f32 %v523, 1.0
  %v525 = vrcp.pop %v524
  %v526 = vmul.f32 1.0, %v525
  %v527 = vtanh.pop %v518
  %v528 = vmul.f32 %v526, %v433
  %530 = vrot.lane.b32.xlu0 %v527, 32
  %v531 = vpop.permute.xlu0 %530
  %v533 = vmul.f32 %v526, %v531
  %535 = vrot.lane.b32.xlu0 %v533, 32
  %v536 = vpop.permute.xlu0 %535
  %v538 = vadd.f32 %v528, %v536
  %v539 = vtanh.pop %v538
  %541 = vrot.lane.b32.xlu0 %v539, 32
  %v542 = vpop.permute.xlu0 %541
  %v544 = vmul.f32 %v526, %v542
  %vm545 = vcmask 785920
  %546 = vst.msk [vmem:[%s4] sm:$0xff] %vm545, %v544
  %v547 = vld [vmem:[%s225] sm:$0xff]
  %549 = vrot.lane.b32.xlu0 %v544, 64
  %v550 = vpop.permute.xlu0 %549
  %v551 = vsel %vm240, %v550, 0
  %553 = vmatprep.subr.mxu0 0.0
  %554 = vmatpush1.msra.mxu0 0.0
  %555 = vmatprep.subr.mxu0 0.0
  %556 = vmatpush1.msra.mxu0 0.0
  %557 = vmatprep.subr.mxu0 0.0
  %558 = vmatpush1.msra.mxu0 0.0
  %559 = vmatprep.subr.mxu0 0.0
  %560 = vmatpush1.msra.mxu0 0.0
  %561 = vmatprep.subr.mxu0 0.0
  %562 = vmatpush1.msra.mxu0 0.0
  %563 = vmatprep.subr.mxu0 0.0
  %564 = vmatpush1.msra.mxu0 0.0
  %565 = vmatprep.subr.mxu0 0.0
  %566 = vmatpush1.msra.mxu0 0.0
  %567 = vmatprep.subr.mxu0 0.0
  %568 = vmatpush1.msra.mxu0 0.0
  %569 = vmatprep.subr.mxu0 0.0
  %570 = vmatpush1.msra.mxu0 0.0
  %571 = vmatprep.subr.mxu0 0.0
  %572 = vmatpush1.msra.mxu0 0.0
  %573 = vmatprep.subr.mxu0 0.0
  %574 = vmatpush1.msra.mxu0 0.0
  %575 = vmatprep.subr.mxu0 0.0
  %576 = vmatpush1.msra.mxu0 0.0
  %577 = vmatprep.subr.mxu0 0.0
  %578 = vmatpush1.msra.mxu0 %v238
  %579 = vmatprep.subr.mxu0 0.0
  %580 = vmatpush1.msra.mxu0 %v237
  %581 = vmatprep.subr.mxu0 0.0
  %582 = vmatpush1.msra.mxu0 %v236
  %583 = vmatprep.subr.mxu0 0.0
  %584 = vmatpush1.msra.mxu0 %v235
  %585 = vmatprep.subr.mxu0 0.0
  %586 = vmatpush2.msra.mxu0 0.0
  %587 = vmatprep.subr.mxu0 0.0
  %588 = vmatpush2.msra.mxu0 0.0
  %589 = vmatprep.subr.mxu0 0.0
  %590 = vmatpush2.msra.mxu0 0.0
  %591 = vmatprep.subr.mxu0 0.0
  %592 = vmatpush2.msra.mxu0 0.0
  %593 = vmatprep.subr.mxu0 0.0
  %594 = vmatpush2.msra.mxu0 0.0
  %595 = vmatprep.subr.mxu0 0.0
  %596 = vmatpush2.msra.mxu0 0.0
  %597 = vmatprep.subr.mxu0 0.0
  %598 = vmatpush2.msra.mxu0 0.0
  %599 = vmatprep.subr.mxu0 0.0
  %600 = vmatpush2.msra.mxu0 0.0
  %601 = vmatprep.subr.mxu0 0.0
  %602 = vmatpush2.msra.mxu0 0.0
  %603 = vmatprep.subr.mxu0 0.0
  %604 = vmatpush2.msra.mxu0 0.0
  %605 = vmatprep.subr.mxu0 0.0
  %606 = vmatpush2.msra.mxu0 0.0
  %607 = vmatprep.subr.mxu0 0.0
  %608 = vmatpush2.msra.mxu0 0.0
  %609 = vmatprep.subr.mxu0 0.0
  %610 = vmatpush2.msra.mxu0 0.0
  %611 = vmatprep.subr.mxu0 0.0
  %612 = vmatpush2.msra.mxu0 0.0
  %613 = vmatprep.subr.mxu0 0.0
  %614 = vmatpush2.msra.mxu0 0.0
  %615 = vmatprep.subr.mxu0 0.0
  %616 = vmatpush2.msra.mxu0 0.0
  %617 = vmatprep.mubr.f32.mxu0 0.0
  %618 = vmatmul.mubr.f32.gmra.mxu0 %v551
  %v619 = vpop.f32.mrf.mxu0
  %v620 = vadd.f32 %v547, %v619
  %v621 = vpop.f32.mrf.mxu0
  %622 = vdwg.mxu0
  %v623 = vxor.u32 %v620, 2147483648
  %v624 = vmul.f32 %v623, 1.442695
  %v625 = vpow.pop %v624
  %v626 = vadd.f32 %v625, 1.0
  %v627 = vrcp.pop %v626
  %v628 = vmul.f32 1.0, %v627
  %v629 = vtanh.pop %v620
  %v630 = vmul.f32 %v628, %v538
  %632 = vrot.lane.b32.xlu0 %v629, 32
  %v633 = vpop.permute.xlu0 %632
  %v635 = vmul.f32 %v628, %v633
  %637 = vrot.lane.b32.xlu0 %v635, 32
  %v638 = vpop.permute.xlu0 %637
  %v640 = vadd.f32 %v630, %v638
  %v641 = vtanh.pop %v640
  %643 = vrot.lane.b32.xlu0 %v641, 32
  %v644 = vpop.permute.xlu0 %643
  %v646 = vmul.f32 %v628, %v644
  %648 = vrot.lane.b32.xlu0 %v646, 32
  %v649 = vpop.permute.xlu0 %648
  %vm651 = vcmask 1048320
  %652 = vst.msk [vmem:[%s4] sm:$0xff] %vm651, %v649
  %v653 = vld [vmem:[%s227] sm:$0xff]
  %654 = vrot.lane.b32.xlu0 %v646, 64
  %v655 = vpop.permute.xlu0 %654
  %v656 = vsel %vm240, %v655, 0
  %658 = vmatprep.subr.mxu0 0.0
  %659 = vmatpush1.msra.mxu0 0.0
  %660 = vmatprep.subr.mxu0 0.0
  %661 = vmatpush1.msra.mxu0 0.0
  %662 = vmatprep.subr.mxu0 0.0
  %663 = vmatpush1.msra.mxu0 0.0
  %664 = vmatprep.subr.mxu0 0.0
  %665 = vmatpush1.msra.mxu0 0.0
  %666 = vmatprep.subr.mxu0 0.0
  %667 = vmatpush1.msra.mxu0 0.0
  %668 = vmatprep.subr.mxu0 0.0
  %669 = vmatpush1.msra.mxu0 0.0
  %670 = vmatprep.subr.mxu0 0.0
  %671 = vmatpush1.msra.mxu0 0.0
  %672 = vmatprep.subr.mxu0 0.0
  %673 = vmatpush1.msra.mxu0 0.0
  %674 = vmatprep.subr.mxu0 0.0
  %675 = vmatpush1.msra.mxu0 0.0
  %676 = vmatprep.subr.mxu0 0.0
  %677 = vmatpush1.msra.mxu0 0.0
  %678 = vmatprep.subr.mxu0 0.0
  %679 = vmatpush1.msra.mxu0 0.0
  %680 = vmatprep.subr.mxu0 0.0
  %681 = vmatpush1.msra.mxu0 0.0
  %682 = vmatprep.subr.mxu0 0.0
  %683 = vmatpush1.msra.mxu0 %v238
  %684 = vmatprep.subr.mxu0 0.0
  %685 = vmatpush1.msra.mxu0 %v237
  %686 = vmatprep.subr.mxu0 0.0
  %687 = vmatpush1.msra.mxu0 %v236
  %688 = vmatprep.subr.mxu0 0.0
  %689 = vmatpush1.msra.mxu0 %v235
  %690 = vmatprep.subr.mxu0 0.0
  %691 = vmatpush2.msra.mxu0 0.0
  %692 = vmatprep.subr.mxu0 0.0
  %693 = vmatpush2.msra.mxu0 0.0
  %694 = vmatprep.subr.mxu0 0.0
  %695 = vmatpush2.msra.mxu0 0.0
  %696 = vmatprep.subr.mxu0 0.0
  %697 = vmatpush2.msra.mxu0 0.0
  %698 = vmatprep.subr.mxu0 0.0
  %699 = vmatpush2.msra.mxu0 0.0
  %700 = vmatprep.subr.mxu0 0.0
  %701 = vmatpush2.msra.mxu0 0.0
  %702 = vmatprep.subr.mxu0 0.0
  %703 = vmatpush2.msra.mxu0 0.0
  %704 = vmatprep.subr.mxu0 0.0
  %705 = vmatpush2.msra.mxu0 0.0
  %706 = vmatprep.subr.mxu0 0.0
  %707 = vmatpush2.msra.mxu0 0.0
  %708 = vmatprep.subr.mxu0 0.0
  %709 = vmatpush2.msra.mxu0 0.0
  %710 = vmatprep.subr.mxu0 0.0
  %711 = vmatpush2.msra.mxu0 0.0
  %712 = vmatprep.subr.mxu0 0.0
  %713 = vmatpush2.msra.mxu0 0.0
  %714 = vmatprep.subr.mxu0 0.0
  %715 = vmatpush2.msra.mxu0 0.0
  %716 = vmatprep.subr.mxu0 0.0
  %717 = vmatpush2.msra.mxu0 0.0
  %718 = vmatprep.subr.mxu0 0.0
  %719 = vmatpush2.msra.mxu0 0.0
  %720 = vmatprep.subr.mxu0 0.0
  %721 = vmatpush2.msra.mxu0 0.0
  %722 = vmatprep.mubr.f32.mxu0 0.0
  %723 = vmatmul.mubr.f32.gmra.mxu0 %v656
  %v724 = vpop.f32.mrf.mxu0
  %v725 = vadd.f32 %v653, %v724
  %v726 = vpop.f32.mrf.mxu0
  %727 = vdwg.mxu0
  %v728 = vxor.u32 %v725, 2147483648
  %v729 = vmul.f32 %v728, 1.442695
  %v730 = vpow.pop %v729
  %v731 = vadd.f32 %v730, 1.0
  %v732 = vrcp.pop %v731
  %v733 = vmul.f32 1.0, %v732
  %v734 = vtanh.pop %v725
  %v735 = vmul.f32 %v733, %v640
  %737 = vrot.lane.b32.xlu0 %v734, 32
  %v738 = vpop.permute.xlu0 %737
  %v740 = vmul.f32 %v733, %v738
  %742 = vrot.lane.b32.xlu0 %v740, 32
  %v743 = vpop.permute.xlu0 %742
  %v745 = vadd.f32 %v735, %v743
  %v746 = vtanh.pop %v745
  %748 = vrot.lane.b32.xlu0 %v746, 32
  %v749 = vpop.permute.xlu0 %748
  %v751 = vmul.f32 %v733, %v749
  %753 = vrot.lane.b32.xlu0 %v751, 64
  %v754 = vpop.permute.xlu0 %753
  %756 = vst.msk [vmem:[%s4 + $0x8] sm:$0xff] %vm240, %v754
  %v757 = vld [vmem:[%s229] sm:$0xff]
  %v758 = vsel %vm240, %v754, 0
  %760 = vmatprep.subr.mxu0 0.0
  %761 = vmatpush1.msra.mxu0 0.0
  %762 = vmatprep.subr.mxu0 0.0
  %763 = vmatpush1.msra.mxu0 0.0
  %764 = vmatprep.subr.mxu0 0.0
  %765 = vmatpush1.msra.mxu0 0.0
  %766 = vmatprep.subr.mxu0 0.0
  %767 = vmatpush1.msra.mxu0 0.0
  %768 = vmatprep.subr.mxu0 0.0
  %769 = vmatpush1.msra.mxu0 0.0
  %770 = vmatprep.subr.mxu0 0.0
  %771 = vmatpush1.msra.mxu0 0.0
  %772 = vmatprep.subr.mxu0 0.0
  %773 = vmatpush1.msra.mxu0 0.0
  %774 = vmatprep.subr.mxu0 0.0
  %775 = vmatpush1.msra.mxu0 0.0
  %776 = vmatprep.subr.mxu0 0.0
  %777 = vmatpush1.msra.mxu0 0.0
  %778 = vmatprep.subr.mxu0 0.0
  %779 = vmatpush1.msra.mxu0 0.0
  %780 = vmatprep.subr.mxu0 0.0
  %781 = vmatpush1.msra.mxu0 0.0
  %782 = vmatprep.subr.mxu0 0.0
  %783 = vmatpush1.msra.mxu0 0.0
  %784 = vmatprep.subr.mxu0 0.0
  %785 = vmatpush1.msra.mxu0 %v238
  %786 = vmatprep.subr.mxu0 0.0
  %787 = vmatpush1.msra.mxu0 %v237
  %788 = vmatprep.subr.mxu0 0.0
  %789 = vmatpush1.msra.mxu0 %v236
  %790 = vmatprep.subr.mxu0 0.0
  %791 = vmatpush1.msra.mxu0 %v235
  %792 = vmatprep.subr.mxu0 0.0
  %793 = vmatpush2.msra.mxu0 0.0
  %794 = vmatprep.subr.mxu0 0.0
  %795 = vmatpush2.msra.mxu0 0.0
  %796 = vmatprep.subr.mxu0 0.0
  %797 = vmatpush2.msra.mxu0 0.0
  %798 = vmatprep.subr.mxu0 0.0
  %799 = vmatpush2.msra.mxu0 0.0
  %800 = vmatprep.subr.mxu0 0.0
  %801 = vmatpush2.msra.mxu0 0.0
  %802 = vmatprep.subr.mxu0 0.0
  %803 = vmatpush2.msra.mxu0 0.0
  %804 = vmatprep.subr.mxu0 0.0
  %805 = vmatpush2.msra.mxu0 0.0
  %806 = vmatprep.subr.mxu0 0.0
  %807 = vmatpush2.msra.mxu0 0.0
  %808 = vmatprep.subr.mxu0 0.0
  %809 = vmatpush2.msra.mxu0 0.0
  %810 = vmatprep.subr.mxu0 0.0
  %811 = vmatpush2.msra.mxu0 0.0
  %812 = vmatprep.subr.mxu0 0.0
  %813 = vmatpush2.msra.mxu0 0.0
  %814 = vmatprep.subr.mxu0 0.0
  %815 = vmatpush2.msra.mxu0 0.0
  %816 = vmatprep.subr.mxu0 0.0
  %817 = vmatpush2.msra.mxu0 0.0
  %818 = vmatprep.subr.mxu0 0.0
  %819 = vmatpush2.msra.mxu0 0.0
  %820 = vmatprep.subr.mxu0 0.0
  %821 = vmatpush2.msra.mxu0 0.0
  %822 = vmatprep.subr.mxu0 0.0
  %823 = vmatpush2.msra.mxu0 0.0
  %824 = vmatprep.mubr.f32.mxu0 0.0
  %825 = vmatmul.mubr.f32.gmra.mxu0 %v758
  %v826 = vpop.f32.mrf.mxu0
  %v827 = vadd.f32 %v757, %v826
  %v828 = vpop.f32.mrf.mxu0
  %829 = vdwg.mxu0
  %v830 = vxor.u32 %v827, 2147483648
  %v831 = vmul.f32 %v830, 1.442695
  %v832 = vpow.pop %v831
  %v833 = vadd.f32 %v832, 1.0
  %v834 = vrcp.pop %v833
  %v835 = vmul.f32 1.0, %v834
  %v836 = vtanh.pop %v827
  %v837 = vmul.f32 %v835, %v745
  %839 = vrot.lane.b32.xlu0 %v836, 32
  %v840 = vpop.permute.xlu0 %839
  %v842 = vmul.f32 %v835, %v840
  %844 = vrot.lane.b32.xlu0 %v842, 32
  %v845 = vpop.permute.xlu0 %844
  %v847 = vadd.f32 %v837, %v845
  %v848 = vtanh.pop %v847
  %850 = vrot.lane.b32.xlu0 %v848, 32
  %v851 = vpop.permute.xlu0 %850
  %v853 = vmul.f32 %v835, %v851
  %855 = vrot.lane.b32.xlu0 %v853, 96
  %v856 = vpop.permute.xlu0 %855
  %858 = vst.msk [vmem:[%s4 + $0x8] sm:$0xff] %vm444, %v856
  %v859 = vld [vmem:[%s231] sm:$0xff]
  %860 = vrot.lane.b32.xlu0 %v853, 64
  %v861 = vpop.permute.xlu0 %860
  %v862 = vsel %vm240, %v861, 0
  %864 = vmatprep.subr.mxu0 0.0
  %865 = vmatpush1.msra.mxu0 0.0
  %866 = vmatprep.subr.mxu0 0.0
  %867 = vmatpush1.msra.mxu0 0.0
  %868 = vmatprep.subr.mxu0 0.0
  %869 = vmatpush1.msra.mxu0 0.0
  %870 = vmatprep.subr.mxu0 0.0
  %871 = vmatpush1.msra.mxu0 0.0
  %872 = vmatprep.subr.mxu0 0.0
  %873 = vmatpush1.msra.mxu0 0.0
  %874 = vmatprep.subr.mxu0 0.0
  %875 = vmatpush1.msra.mxu0 0.0
  %876 = vmatprep.subr.mxu0 0.0
  %877 = vmatpush1.msra.mxu0 0.0
  %878 = vmatprep.subr.mxu0 0.0
  %879 = vmatpush1.msra.mxu0 0.0
  %880 = vmatprep.subr.mxu0 0.0
  %881 = vmatpush1.msra.mxu0 0.0
  %882 = vmatprep.subr.mxu0 0.0
  %883 = vmatpush1.msra.mxu0 0.0
  %884 = vmatprep.subr.mxu0 0.0
  %885 = vmatpush1.msra.mxu0 0.0
  %886 = vmatprep.subr.mxu0 0.0
  %887 = vmatpush1.msra.mxu0 0.0
  %888 = vmatprep.subr.mxu0 0.0
  %889 = vmatpush1.msra.mxu0 %v238
  %890 = vmatprep.subr.mxu0 0.0
  %891 = vmatpush1.msra.mxu0 %v237
  %892 = vmatprep.subr.mxu0 0.0
  %893 = vmatpush1.msra.mxu0 %v236
  %894 = vmatprep.subr.mxu0 0.0
  %895 = vmatpush1.msra.mxu0 %v235
  %896 = vmatprep.subr.mxu0 0.0
  %897 = vmatpush2.msra.mxu0 0.0
  %898 = vmatprep.subr.mxu0 0.0
  %899 = vmatpush2.msra.mxu0 0.0
  %900 = vmatprep.subr.mxu0 0.0
  %901 = vmatpush2.msra.mxu0 0.0
  %902 = vmatprep.subr.mxu0 0.0
  %903 = vmatpush2.msra.mxu0 0.0
  %904 = vmatprep.subr.mxu0 0.0
  %905 = vmatpush2.msra.mxu0 0.0
  %906 = vmatprep.subr.mxu0 0.0
  %907 = vmatpush2.msra.mxu0 0.0
  %908 = vmatprep.subr.mxu0 0.0
  %909 = vmatpush2.msra.mxu0 0.0
  %910 = vmatprep.subr.mxu0 0.0
  %911 = vmatpush2.msra.mxu0 0.0
  %912 = vmatprep.subr.mxu0 0.0
  %913 = vmatpush2.msra.mxu0 0.0
  %914 = vmatprep.subr.mxu0 0.0
  %915 = vmatpush2.msra.mxu0 0.0
  %916 = vmatprep.subr.mxu0 0.0
  %917 = vmatpush2.msra.mxu0 0.0
  %918 = vmatprep.subr.mxu0 0.0
  %919 = vmatpush2.msra.mxu0 0.0
  %920 = vmatprep.subr.mxu0 0.0
  %921 = vmatpush2.msra.mxu0 0.0
  %922 = vmatprep.subr.mxu0 0.0
  %923 = vmatpush2.msra.mxu0 0.0
  %924 = vmatprep.subr.mxu0 0.0
  %925 = vmatpush2.msra.mxu0 0.0
  %926 = vmatprep.subr.mxu0 0.0
  %927 = vmatpush2.msra.mxu0 0.0
  %928 = vmatprep.mubr.f32.mxu0 0.0
  %929 = vmatmul.mubr.f32.gmra.mxu0 %v862
  %v930 = vpop.f32.mrf.mxu0
  %v931 = vadd.f32 %v859, %v930
  %v932 = vpop.f32.mrf.mxu0
  %933 = vdwg.mxu0
  %v934 = vxor.u32 %v931, 2147483648
  %v935 = vmul.f32 %v934, 1.442695
  %v936 = vpow.pop %v935
  %v937 = vadd.f32 %v936, 1.0
  %v938 = vrcp.pop %v937
  %v939 = vmul.f32 1.0, %v938
  %v940 = vtanh.pop %v931
  %v941 = vmul.f32 %v939, %v847
  %943 = vrot.lane.b32.xlu0 %v940, 32
  %v944 = vpop.permute.xlu0 %943
  %v946 = vmul.f32 %v939, %v944
  %948 = vrot.lane.b32.xlu0 %v946, 32
  %v949 = vpop.permute.xlu0 %948
  %v951 = vadd.f32 %v941, %v949
  %v952 = vtanh.pop %v951
  %954 = vrot.lane.b32.xlu0 %v952, 32
  %v955 = vpop.permute.xlu0 %954
  %v957 = vmul.f32 %v939, %v955
  %958 = vst.msk [vmem:[%s4 + $0x8] sm:$0xff] %vm545, %v957
  %v959 = vld [vmem:[%s233] sm:$0xff]
  %961 = vrot.lane.b32.xlu0 %v957, 64
  %v962 = vpop.permute.xlu0 %961
  %v963 = vsel %vm240, %v962, 0
  %965 = vmatprep.subr.mxu0 0.0
  %966 = vmatpush1.msra.mxu0 0.0
  %967 = vmatprep.subr.mxu0 0.0
  %968 = vmatpush1.msra.mxu0 0.0
  %969 = vmatprep.subr.mxu0 0.0
  %970 = vmatpush1.msra.mxu0 0.0
  %971 = vmatprep.subr.mxu0 0.0
  %972 = vmatpush1.msra.mxu0 0.0
  %973 = vmatprep.subr.mxu0 0.0
  %974 = vmatpush1.msra.mxu0 0.0
  %975 = vmatprep.subr.mxu0 0.0
  %976 = vmatpush1.msra.mxu0 0.0
  %977 = vmatprep.subr.mxu0 0.0
  %978 = vmatpush1.msra.mxu0 0.0
  %979 = vmatprep.subr.mxu0 0.0
  %980 = vmatpush1.msra.mxu0 0.0
  %981 = vmatprep.subr.mxu0 0.0
  %982 = vmatpush1.msra.mxu0 0.0
  %983 = vmatprep.subr.mxu0 0.0
  %984 = vmatpush1.msra.mxu0 0.0
  %985 = vmatprep.subr.mxu0 0.0
  %986 = vmatpush1.msra.mxu0 0.0
  %987 = vmatprep.subr.mxu0 0.0
  %988 = vmatpush1.msra.mxu0 0.0
  %989 = vmatprep.subr.mxu0 0.0
  %990 = vmatpush1.msra.mxu0 %v238
  %991 = vmatprep.subr.mxu0 0.0
  %992 = vmatpush1.msra.mxu0 %v237
  %993 = vmatprep.subr.mxu0 0.0
  %994 = vmatpush1.msra.mxu0 %v236
  %995 = vmatprep.subr.mxu0 0.0
  %996 = vmatpush1.msra.mxu0 %v235
  %997 = vmatprep.subr.mxu0 0.0
  %998 = vmatpush2.msra.mxu0 0.0
  %999 = vmatprep.subr.mxu0 0.0
  %1000 = vmatpush2.msra.mxu0 0.0
  %1001 = vmatprep.subr.mxu0 0.0
  %1002 = vmatpush2.msra.mxu0 0.0
  %1003 = vmatprep.subr.mxu0 0.0
  %1004 = vmatpush2.msra.mxu0 0.0
  %1005 = vmatprep.subr.mxu0 0.0
  %1006 = vmatpush2.msra.mxu0 0.0
  %1007 = vmatprep.subr.mxu0 0.0
  %1008 = vmatpush2.msra.mxu0 0.0
  %1009 = vmatprep.subr.mxu0 0.0
  %1010 = vmatpush2.msra.mxu0 0.0
  %1011 = vmatprep.subr.mxu0 0.0
  %1012 = vmatpush2.msra.mxu0 0.0
  %1013 = vmatprep.subr.mxu0 0.0
  %1014 = vmatpush2.msra.mxu0 0.0
  %1015 = vmatprep.subr.mxu0 0.0
  %1016 = vmatpush2.msra.mxu0 0.0
  %1017 = vmatprep.subr.mxu0 0.0
  %1018 = vmatpush2.msra.mxu0 0.0
  %1019 = vmatprep.subr.mxu0 0.0
  %1020 = vmatpush2.msra.mxu0 0.0
  %1021 = vmatprep.subr.mxu0 0.0
  %1022 = vmatpush2.msra.mxu0 0.0
  %1023 = vmatprep.subr.mxu0 0.0
  %1024 = vmatpush2.msra.mxu0 0.0
  %1025 = vmatprep.subr.mxu0 0.0
  %1026 = vmatpush2.msra.mxu0 0.0
  %1027 = vmatprep.subr.mxu0 0.0
  %1028 = vmatpush2.msra.mxu0 0.0
  %1029 = vmatprep.mubr.f32.mxu0 0.0
  %1030 = vmatmul.mubr.f32.gmra.mxu0 %v963
  %v1031 = vpop.f32.mrf.mxu0
  %v1032 = vadd.f32 %v959, %v1031
  %v1033 = vpop.f32.mrf.mxu0
  %1034 = vdwg.mxu0
  %v1035 = vxor.u32 %v1032, 2147483648
  %v1036 = vmul.f32 %v1035, 1.442695
  %v1037 = vpow.pop %v1036
  %v1038 = vadd.f32 %v1037, 1.0
  %v1039 = vrcp.pop %v1038
  %v1040 = vmul.f32 1.0, %v1039
  %v1041 = vtanh.pop %v1032
  %v1042 = vmul.f32 %v1040, %v951
  %1044 = vrot.lane.b32.xlu0 %v1041, 32
  %v1045 = vpop.permute.xlu0 %1044
  %v1047 = vmul.f32 %v1040, %v1045
  %1049 = vrot.lane.b32.xlu0 %v1047, 32
  %v1050 = vpop.permute.xlu0 %1049
  %v1052 = vadd.f32 %v1042, %v1050
  %v1053 = vtanh.pop %v1052
  %1055 = vrot.lane.b32.xlu0 %v1053, 32
  %v1056 = vpop.permute.xlu0 %1055
  %v1058 = vmul.f32 %v1040, %v1056
  %1060 = vrot.lane.b32.xlu0 %v1058, 32
  %v1061 = vpop.permute.xlu0 %1060
  %1063 = vst.msk [vmem:[%s4 + $0x8] sm:$0xff] %vm651, %v1061
  %1064 = vrot.lane.b32.xlu0 %v1058, 64
  %v1065 = vpop.permute.xlu0 %1064
  %1067 = vst.msk [vmem:[%s3] sm:$0xff] %vm240, %v1065
  // Predicated region
  $region14: #{step_selector_encoder.1} parent=0 // pred_check
    _
  $region15: #{step_selector_encoder.1} parent=0 // pred_check_branch
    %1069 = sbr.rel (0) target = $region17
  $region16: #{step_selector_encoder.1} parent=0 // pred_region
    _
  $region17: #{step_selector_encoder.1} parent=0 // pred_fallthru
    _
  // Predicated region
  $region18: #{step_selector_encoder.1} parent=0 // pred_check
    _
  $region19: #{step_selector_encoder.1} parent=0 // pred_check_branch
    %1071 = sbr.rel (0) target = $region21
  $region20: #{step_selector_encoder.1} parent=0 // pred_region
    _
  $region21: #{step_selector_encoder.1} parent=0 // pred_fallthru
    _
  // Predicated region
  $region22: #{step_selector_encoder.1} parent=0 // pred_check
    _
  $region23: #{step_selector_encoder.1} parent=0 // pred_check_branch
    %1073 = sbr.rel (0) target = $region25
  $region24: #{step_selector_encoder.1} parent=0 // pred_region
    _
  $region25: #{step_selector_encoder.1} parent=0 // pred_fallthru
    _
  // Predicated region
  $region26: #{step_selector_encoder.1} parent=0 // pred_check
    _
  $region27: #{step_selector_encoder.1} parent=0 // pred_check_branch
    %1075 = sbr.rel (0) target = $region29
  $region28: #{step_selector_encoder.1} parent=0 // pred_region
    _
  $region29: #{step_selector_encoder.1} parent=0 // pred_fallthru
    _

</llo_original>
